<compile_context>
chip_gen: v6e
topology: v6e:2x2x1
jax: 0.10.0
libtpu: 0.0.40
codegen_flags: <defaults>
</compile_context>

<pallas_src>
import jax
import jax.numpy as jnp
from jax.experimental import pallas as pl
from jax.experimental.pallas import tpu as pltpu


def _round_up(x, m):
    return (x + m - 1) // m * m


def _make_kernel(Ks, W, D, Co_pad, row_offsets, TILE_N):
    n_k = len(Ks)

    def kernel(x_ref, w_ref, b_ref, wfc_ref, bfc_ref, out_ref):
        x = x_ref[...]                      # (W, TILE_N, D) bf16, seq-major
        b_all = b_ref[...]                  # (n_k, Co_pad) f32
        feats = []
        for i, K in enumerate(Ks):
            L = W - K + 1
            acc = jnp.zeros((L * TILE_N, Co_pad), jnp.float32)
            for k in range(K):              # static unroll over conv taps
                # Leading-axis slice (no sublane relayout) + tile-preserving merge.
                xk = x[k:k + L].reshape(L * TILE_N, D)
                r0 = row_offsets[i] + k * D
                wk = w_ref[r0:r0 + D, :]    # (D, Co_pad) bf16, static slice
                acc = acc + jnp.dot(xk, wk, preferred_element_type=jnp.float32)
            acc = jnp.maximum(acc + b_all[i:i + 1, :], 0.0)          # bias + ReLU
            # max_pool1d over time: reduce over the leading axis (pure VPU max).
            pooled = jnp.max(acc.reshape(L, TILE_N, Co_pad), axis=0)  # (TILE_N, Co_pad)
            feats.append(pooled)
        feat = jnp.concatenate(feats, axis=1)                         # (TILE_N, n_k*Co_pad)
        out_ref[...] = (jnp.dot(feat, wfc_ref[...],
                                preferred_element_type=jnp.float32)
                        + bfc_ref[...])                               # (TILE_N, C_pad)

    return kernel


def cnn_text_forward(x, conv_ws, conv_bs, wfc, bfc, Ks, *, tile_n=256):
    N, W, D = x.shape
    Co = conv_ws[0].shape[-1]
    C = wfc.shape[-1]
    n_k = len(Ks)

    Co_pad = _round_up(max(Co, 128), 128)   # lane-dense conv channels
    C_pad = _round_up(max(C, 128), 128)     # lane-dense logits

    TILE_N = min(tile_n, _round_up(N, 16))  # multiple of 16 keeps bf16 tiles aligned
    N_pad = _round_up(N, TILE_N)

    # x: zero-pad batch, cast to bf16, seq-major layout (W, N_pad, D).
    xp = jnp.zeros((N_pad, W, D), jnp.bfloat16).at[:N].set(x.astype(jnp.bfloat16))
    xt = jnp.transpose(xp, (1, 0, 2))

    # Conv weights: pad Co -> Co_pad, flatten every (kernel_size i, tap k) block
    # into one resident (sum(Ks)*D, Co_pad) bf16 operand.
    blocks, row_offsets, off = [], [], 0
    for w in conv_ws:
        K = w.shape[0]
        row_offsets.append(off)
        wp = jnp.zeros((K, D, Co_pad), jnp.float32).at[:, :, :Co].set(w)
        blocks.append(wp.reshape(K * D, Co_pad))
        off += K * D
    w_flat = jnp.concatenate(blocks, axis=0).astype(jnp.bfloat16)

    b_cat = jnp.zeros((n_k, Co_pad), jnp.float32)
    for i, b in enumerate(conv_bs):
        b_cat = b_cat.at[i, :Co].set(b.reshape(-1))

    # FC weight, re-laid-out to the padded feature layout (block i occupies rows
    # [i*Co_pad, i*Co_pad+Co)); padded rows/cols are zero so padding can't leak.
    F_pad = n_k * Co_pad
    wfc_pad = jnp.zeros((F_pad, C_pad), jnp.float32)
    for i in range(n_k):
        wfc_pad = wfc_pad.at[i * Co_pad:i * Co_pad + Co, :C].set(
            wfc[i * Co:(i + 1) * Co, :])
    bfc_pad = jnp.zeros((1, C_pad), jnp.float32).at[:, :C].set(bfc.reshape(1, C))

    kernel = _make_kernel(Ks, W, D, Co_pad, tuple(row_offsets), TILE_N)

    out = pl.pallas_call(
        kernel,
        out_shape=jax.ShapeDtypeStruct((N_pad, C_pad), jnp.float32),
        grid=(N_pad // TILE_N,),
        in_specs=[
            pl.BlockSpec((W, TILE_N, D), lambda n: (0, n, 0)),
            # Constant index_maps -> weights stay resident in VMEM across the grid.
            pl.BlockSpec(w_flat.shape, lambda n: (0, 0)),
            pl.BlockSpec(b_cat.shape, lambda n: (0, 0)),
            pl.BlockSpec(wfc_pad.shape, lambda n: (0, 0)),
            pl.BlockSpec(bfc_pad.shape, lambda n: (0, 0)),
        ],
        out_specs=pl.BlockSpec((TILE_N, C_pad), lambda n: (n, 0)),
        compiler_params=pltpu.CompilerParams(
            dimension_semantics=("parallel",)),
    )(xt, w_flat, b_cat, wfc_pad, bfc_pad)
    return out[:N, :C]


def reference_forward(x, conv_ws, conv_bs, wfc, bfc, Ks):
    """Pure-JAX reference mirroring the PyTorch forward (eval mode).

    Inputs to the conv matmuls are rounded to bf16 (same quantization the
    kernel uses), accumulation in f32.
    """
    x = x.astype(jnp.bfloat16).astype(jnp.float32)
    N, W, D = x.shape
    feats = []
    for w, b, K in zip(conv_ws, conv_bs, Ks):
        w = w.astype(jnp.bfloat16).astype(jnp.float32)
        Co = w.shape[-1]
        L = W - K + 1
        conv = jnp.zeros((N, L, Co), jnp.float32)
        for k in range(K):
            conv = conv + jnp.einsum('nld,dc->nlc', x[:, k:k + L, :], w[k])
        conv = jnp.maximum(conv + b.reshape(1, 1, Co), 0.0)
        feats.append(jnp.max(conv, axis=1))            # (N, Co)
    feat = jnp.concatenate(feats, axis=1)              # (N, len(Ks)*Co)
    return feat @ wfc + bfc


if __name__ == "__main__":
    # Module hyperparameters (small, consistent with CNN_Text.__init__)
    embed_dim = 32          # D
    class_num = 4           # C
    kernel_num = 8          # Co
    kernel_sizes = (3, 4, 5)
    # dropout = 0.5 (identity at inference)

    N, W, D = 2, 16, embed_dim
    Co, C = kernel_num, class_num
    F = len(kernel_sizes) * Co

    key = jax.random.PRNGKey(0)
    keys = jax.random.split(key, 2 * len(kernel_sizes) + 3)

    x = jax.random.normal(keys[0], (N, W, D), dtype=jnp.float32)

    conv_ws, conv_bs = [], []
    for i, K in enumerate(kernel_sizes):
        # PyTorch weight is (Co, 1, K, D); stored here as (K, D, Co) for the matmul form.
        conv_ws.append(0.1 * jax.random.normal(keys[1 + 2 * i], (K, D, Co),
                                               dtype=jnp.float32))
        conv_bs.append(0.1 * jax.random.normal(keys[2 + 2 * i], (1, Co),
                                               dtype=jnp.float32))
    # PyTorch fc1 weight is (C, F); stored transposed as (F, C).
    wfc = 0.1 * jax.random.normal(keys[-2], (F, C), dtype=jnp.float32)
    bfc = 0.1 * jax.random.normal(keys[-1], (1, C), dtype=jnp.float32)

    logits = cnn_text_forward(x, conv_ws, conv_bs, wfc, bfc, kernel_sizes)
    logits = jax.block_until_ready(logits)

    ref = reference_forward(x, conv_ws, conv_bs, wfc, bfc, kernel_sizes)
    assert logits.shape == (N, C)
    assert jnp.allclose(logits, ref, atol=1e-3, rtol=1e-3), "mismatch vs reference"

    print("KERNEL_OK")
</pallas_src>

<mosaic_0001>
module attributes {stable_mosaic.version = 11 : i64} {
  func.func @kernel(%arg0: i32, %arg1: memref<16x16x32xbf16, #tpu.memory_space<vmem>>, %arg2: memref<384x128xbf16, #tpu.memory_space<vmem>>, %arg3: memref<3x128xf32, #tpu.memory_space<vmem>>, %arg4: memref<384x128xf32, #tpu.memory_space<vmem>>, %arg5: memref<1x128xf32, #tpu.memory_space<vmem>>, %arg6: memref<16x128xf32, #tpu.memory_space<vmem>>) attributes {dimension_semantics = [#tpu.dimension_semantics<parallel>], iteration_bounds = array<i64: 1>, scalar_prefetch = 0 : i64, scratch_operands = 0 : i64, tpu.core_type = #tpu.core_type<tc>, window_params = [{transform_indices = @transform_0, window_bounds = array<i64: 16, 16, 32>}, {pipeline_mode = #tpu.pipeline_mode<synchronous>, transform_indices = @transform_1, window_bounds = array<i64: 384, 128>}, {pipeline_mode = #tpu.pipeline_mode<synchronous>, transform_indices = @transform_2, window_bounds = array<i64: 3, 128>}, {pipeline_mode = #tpu.pipeline_mode<synchronous>, transform_indices = @transform_3, window_bounds = array<i64: 384, 128>}, {pipeline_mode = #tpu.pipeline_mode<synchronous>, transform_indices = @transform_4, window_bounds = array<i64: 1, 128>}, {transform_indices = @transform_5, window_bounds = array<i64: 16, 128>}]} {
    %c0 = arith.constant 0 : index
    %c0_0 = arith.constant 0 : index
    %c0_1 = arith.constant 0 : index
    %0 = vector.load %arg1[%c0, %c0_0, %c0_1] : memref<16x16x32xbf16, #tpu.memory_space<vmem>>, vector<16x16x32xbf16>
    %c0_2 = arith.constant 0 : index
    %c0_3 = arith.constant 0 : index
    %1 = vector.load %arg3[%c0_2, %c0_3] : memref<3x128xf32, #tpu.memory_space<vmem>>, vector<3x128xf32>
    %cst = arith.constant 0.000000e+00 : f32
    %2 = vector.broadcast %cst : f32 to vector<224x128xf32>
    %3 = vector.extract_strided_slice %0 {offsets = [0, 0, 0], sizes = [14, 16, 32], strides = [1, 1, 1]} : vector<16x16x32xbf16> to vector<14x16x32xbf16>
    %4 = vector.shape_cast %3 : vector<14x16x32xbf16> to vector<224x32xbf16>
    %c0_4 = arith.constant 0 : index
    %c0_5 = arith.constant 0 : index
    %5 = vector.load %arg2[%c0_4, %c0_5] : memref<384x128xbf16, #tpu.memory_space<vmem>>, vector<32x128xbf16>
    %cst_6 = arith.constant dense<0.000000e+00> : vector<224x128xf32>
    %6 = tpu.matmul %4, %5, %cst_6 {dimension_numbers = #tpu.dot_dimension_numbers<[1], [0], [0], [1], [0, 0, 1, 1], [], []>} : vector<224x32xbf16>, vector<32x128xbf16>, vector<224x128xf32> -> vector<224x128xf32>
    %7 = arith.addf %2, %6 : vector<224x128xf32>
    %8 = vector.extract_strided_slice %0 {offsets = [1, 0, 0], sizes = [14, 16, 32], strides = [1, 1, 1]} : vector<16x16x32xbf16> to vector<14x16x32xbf16>
    %9 = vector.shape_cast %8 : vector<14x16x32xbf16> to vector<224x32xbf16>
    %c32 = arith.constant 32 : index
    %c0_7 = arith.constant 0 : index
    %10 = vector.load %arg2[%c32, %c0_7] : memref<384x128xbf16, #tpu.memory_space<vmem>>, vector<32x128xbf16>
    %cst_8 = arith.constant dense<0.000000e+00> : vector<224x128xf32>
    %11 = tpu.matmul %9, %10, %cst_8 {dimension_numbers = #tpu.dot_dimension_numbers<[1], [0], [0], [1], [0, 0, 1, 1], [], []>} : vector<224x32xbf16>, vector<32x128xbf16>, vector<224x128xf32> -> vector<224x128xf32>
    %12 = arith.addf %7, %11 : vector<224x128xf32>
    %13 = vector.extract_strided_slice %0 {offsets = [2, 0, 0], sizes = [14, 16, 32], strides = [1, 1, 1]} : vector<16x16x32xbf16> to vector<14x16x32xbf16>
    %14 = vector.shape_cast %13 : vector<14x16x32xbf16> to vector<224x32xbf16>
    %c64 = arith.constant 64 : index
    %c0_9 = arith.constant 0 : index
    %15 = vector.load %arg2[%c64, %c0_9] : memref<384x128xbf16, #tpu.memory_space<vmem>>, vector<32x128xbf16>
    %cst_10 = arith.constant dense<0.000000e+00> : vector<224x128xf32>
    %16 = tpu.matmul %14, %15, %cst_10 {dimension_numbers = #tpu.dot_dimension_numbers<[1], [0], [0], [1], [0, 0, 1, 1], [], []>} : vector<224x32xbf16>, vector<32x128xbf16>, vector<224x128xf32> -> vector<224x128xf32>
    %17 = arith.addf %12, %16 : vector<224x128xf32>
    %18 = vector.extract_strided_slice %1 {offsets = [0, 0], sizes = [1, 128], strides = [1, 1]} : vector<3x128xf32> to vector<1x128xf32>
    %19 = vector.broadcast %18 : vector<1x128xf32> to vector<224x128xf32>
    %20 = arith.addf %17, %19 : vector<224x128xf32>
    %cst_11 = arith.constant 0.000000e+00 : f32
    %21 = vector.broadcast %cst_11 : f32 to vector<224x128xf32>
    %22 = arith.maximumf %20, %21 : vector<224x128xf32>
    %23 = vector.shape_cast %22 : vector<224x128xf32> to vector<14x16x128xf32>
    %cst_12 = arith.constant dense<0xFF800000> : vector<16x128xf32>
    %24 = vector.multi_reduction <maximumf>, %23, %cst_12 [0] : vector<14x16x128xf32> to vector<16x128xf32>
    %cst_13 = arith.constant 0.000000e+00 : f32
    %25 = vector.broadcast %cst_13 : f32 to vector<208x128xf32>
    %26 = vector.extract_strided_slice %0 {offsets = [0, 0, 0], sizes = [13, 16, 32], strides = [1, 1, 1]} : vector<16x16x32xbf16> to vector<13x16x32xbf16>
    %27 = vector.shape_cast %26 : vector<13x16x32xbf16> to vector<208x32xbf16>
    %c96 = arith.constant 96 : index
    %c0_14 = arith.constant 0 : index
    %28 = vector.load %arg2[%c96, %c0_14] : memref<384x128xbf16, #tpu.memory_space<vmem>>, vector<32x128xbf16>
    %cst_15 = arith.constant dense<0.000000e+00> : vector<208x128xf32>
    %29 = tpu.matmul %27, %28, %cst_15 {dimension_numbers = #tpu.dot_dimension_numbers<[1], [0], [0], [1], [0, 0, 1, 1], [], []>} : vector<208x32xbf16>, vector<32x128xbf16>, vector<208x128xf32> -> vector<208x128xf32>
    %30 = arith.addf %25, %29 : vector<208x128xf32>
    %31 = vector.extract_strided_slice %0 {offsets = [1, 0, 0], sizes = [13, 16, 32], strides = [1, 1, 1]} : vector<16x16x32xbf16> to vector<13x16x32xbf16>
    %32 = vector.shape_cast %31 : vector<13x16x32xbf16> to vector<208x32xbf16>
    %c128 = arith.constant 128 : index
    %c0_16 = arith.constant 0 : index
    %33 = vector.load %arg2[%c128, %c0_16] : memref<384x128xbf16, #tpu.memory_space<vmem>>, vector<32x128xbf16>
    %cst_17 = arith.constant dense<0.000000e+00> : vector<208x128xf32>
    %34 = tpu.matmul %32, %33, %cst_17 {dimension_numbers = #tpu.dot_dimension_numbers<[1], [0], [0], [1], [0, 0, 1, 1], [], []>} : vector<208x32xbf16>, vector<32x128xbf16>, vector<208x128xf32> -> vector<208x128xf32>
    %35 = arith.addf %30, %34 : vector<208x128xf32>
    %36 = vector.extract_strided_slice %0 {offsets = [2, 0, 0], sizes = [13, 16, 32], strides = [1, 1, 1]} : vector<16x16x32xbf16> to vector<13x16x32xbf16>
    %37 = vector.shape_cast %36 : vector<13x16x32xbf16> to vector<208x32xbf16>
    %c160 = arith.constant 160 : index
    %c0_18 = arith.constant 0 : index
    %38 = vector.load %arg2[%c160, %c0_18] : memref<384x128xbf16, #tpu.memory_space<vmem>>, vector<32x128xbf16>
    %cst_19 = arith.constant dense<0.000000e+00> : vector<208x128xf32>
    %39 = tpu.matmul %37, %38, %cst_19 {dimension_numbers = #tpu.dot_dimension_numbers<[1], [0], [0], [1], [0, 0, 1, 1], [], []>} : vector<208x32xbf16>, vector<32x128xbf16>, vector<208x128xf32> -> vector<208x128xf32>
    %40 = arith.addf %35, %39 : vector<208x128xf32>
    %41 = vector.extract_strided_slice %0 {offsets = [3, 0, 0], sizes = [13, 16, 32], strides = [1, 1, 1]} : vector<16x16x32xbf16> to vector<13x16x32xbf16>
    %42 = vector.shape_cast %41 : vector<13x16x32xbf16> to vector<208x32xbf16>
    %c192 = arith.constant 192 : index
    %c0_20 = arith.constant 0 : index
    %43 = vector.load %arg2[%c192, %c0_20] : memref<384x128xbf16, #tpu.memory_space<vmem>>, vector<32x128xbf16>
    %cst_21 = arith.constant dense<0.000000e+00> : vector<208x128xf32>
    %44 = tpu.matmul %42, %43, %cst_21 {dimension_numbers = #tpu.dot_dimension_numbers<[1], [0], [0], [1], [0, 0, 1, 1], [], []>} : vector<208x32xbf16>, vector<32x128xbf16>, vector<208x128xf32> -> vector<208x128xf32>
    %45 = arith.addf %40, %44 : vector<208x128xf32>
    %46 = vector.extract_strided_slice %1 {offsets = [1, 0], sizes = [1, 128], strides = [1, 1]} : vector<3x128xf32> to vector<1x128xf32>
    %47 = vector.broadcast %46 : vector<1x128xf32> to vector<208x128xf32>
    %48 = arith.addf %45, %47 : vector<208x128xf32>
    %cst_22 = arith.constant 0.000000e+00 : f32
    %49 = vector.broadcast %cst_22 : f32 to vector<208x128xf32>
    %50 = arith.maximumf %48, %49 : vector<208x128xf32>
    %51 = vector.shape_cast %50 : vector<208x128xf32> to vector<13x16x128xf32>
    %cst_23 = arith.constant dense<0xFF800000> : vector<16x128xf32>
    %52 = vector.multi_reduction <maximumf>, %51, %cst_23 [0] : vector<13x16x128xf32> to vector<16x128xf32>
    %cst_24 = arith.constant 0.000000e+00 : f32
    %53 = vector.broadcast %cst_24 : f32 to vector<192x128xf32>
    %54 = vector.extract_strided_slice %0 {offsets = [0, 0, 0], sizes = [12, 16, 32], strides = [1, 1, 1]} : vector<16x16x32xbf16> to vector<12x16x32xbf16>
    %55 = vector.shape_cast %54 : vector<12x16x32xbf16> to vector<192x32xbf16>
    %c224 = arith.constant 224 : index
    %c0_25 = arith.constant 0 : index
    %56 = vector.load %arg2[%c224, %c0_25] : memref<384x128xbf16, #tpu.memory_space<vmem>>, vector<32x128xbf16>
    %cst_26 = arith.constant dense<0.000000e+00> : vector<192x128xf32>
    %57 = tpu.matmul %55, %56, %cst_26 {dimension_numbers = #tpu.dot_dimension_numbers<[1], [0], [0], [1], [0, 0, 1, 1], [], []>} : vector<192x32xbf16>, vector<32x128xbf16>, vector<192x128xf32> -> vector<192x128xf32>
    %58 = arith.addf %53, %57 : vector<192x128xf32>
    %59 = vector.extract_strided_slice %0 {offsets = [1, 0, 0], sizes = [12, 16, 32], strides = [1, 1, 1]} : vector<16x16x32xbf16> to vector<12x16x32xbf16>
    %60 = vector.shape_cast %59 : vector<12x16x32xbf16> to vector<192x32xbf16>
    %c256 = arith.constant 256 : index
    %c0_27 = arith.constant 0 : index
    %61 = vector.load %arg2[%c256, %c0_27] : memref<384x128xbf16, #tpu.memory_space<vmem>>, vector<32x128xbf16>
    %cst_28 = arith.constant dense<0.000000e+00> : vector<192x128xf32>
    %62 = tpu.matmul %60, %61, %cst_28 {dimension_numbers = #tpu.dot_dimension_numbers<[1], [0], [0], [1], [0, 0, 1, 1], [], []>} : vector<192x32xbf16>, vector<32x128xbf16>, vector<192x128xf32> -> vector<192x128xf32>
    %63 = arith.addf %58, %62 : vector<192x128xf32>
    %64 = vector.extract_strided_slice %0 {offsets = [2, 0, 0], sizes = [12, 16, 32], strides = [1, 1, 1]} : vector<16x16x32xbf16> to vector<12x16x32xbf16>
    %65 = vector.shape_cast %64 : vector<12x16x32xbf16> to vector<192x32xbf16>
    %c288 = arith.constant 288 : index
    %c0_29 = arith.constant 0 : index
    %66 = vector.load %arg2[%c288, %c0_29] : memref<384x128xbf16, #tpu.memory_space<vmem>>, vector<32x128xbf16>
    %cst_30 = arith.constant dense<0.000000e+00> : vector<192x128xf32>
    %67 = tpu.matmul %65, %66, %cst_30 {dimension_numbers = #tpu.dot_dimension_numbers<[1], [0], [0], [1], [0, 0, 1, 1], [], []>} : vector<192x32xbf16>, vector<32x128xbf16>, vector<192x128xf32> -> vector<192x128xf32>
    %68 = arith.addf %63, %67 : vector<192x128xf32>
    %69 = vector.extract_strided_slice %0 {offsets = [3, 0, 0], sizes = [12, 16, 32], strides = [1, 1, 1]} : vector<16x16x32xbf16> to vector<12x16x32xbf16>
    %70 = vector.shape_cast %69 : vector<12x16x32xbf16> to vector<192x32xbf16>
    %c320 = arith.constant 320 : index
    %c0_31 = arith.constant 0 : index
    %71 = vector.load %arg2[%c320, %c0_31] : memref<384x128xbf16, #tpu.memory_space<vmem>>, vector<32x128xbf16>
    %cst_32 = arith.constant dense<0.000000e+00> : vector<192x128xf32>
    %72 = tpu.matmul %70, %71, %cst_32 {dimension_numbers = #tpu.dot_dimension_numbers<[1], [0], [0], [1], [0, 0, 1, 1], [], []>} : vector<192x32xbf16>, vector<32x128xbf16>, vector<192x128xf32> -> vector<192x128xf32>
    %73 = arith.addf %68, %72 : vector<192x128xf32>
    %74 = vector.extract_strided_slice %0 {offsets = [4, 0, 0], sizes = [12, 16, 32], strides = [1, 1, 1]} : vector<16x16x32xbf16> to vector<12x16x32xbf16>
    %75 = vector.shape_cast %74 : vector<12x16x32xbf16> to vector<192x32xbf16>
    %c352 = arith.constant 352 : index
    %c0_33 = arith.constant 0 : index
    %76 = vector.load %arg2[%c352, %c0_33] : memref<384x128xbf16, #tpu.memory_space<vmem>>, vector<32x128xbf16>
    %cst_34 = arith.constant dense<0.000000e+00> : vector<192x128xf32>
    %77 = tpu.matmul %75, %76, %cst_34 {dimension_numbers = #tpu.dot_dimension_numbers<[1], [0], [0], [1], [0, 0, 1, 1], [], []>} : vector<192x32xbf16>, vector<32x128xbf16>, vector<192x128xf32> -> vector<192x128xf32>
    %78 = arith.addf %73, %77 : vector<192x128xf32>
    %79 = vector.extract_strided_slice %1 {offsets = [2, 0], sizes = [1, 128], strides = [1, 1]} : vector<3x128xf32> to vector<1x128xf32>
    %80 = vector.broadcast %79 : vector<1x128xf32> to vector<192x128xf32>
    %81 = arith.addf %78, %80 : vector<192x128xf32>
    %cst_35 = arith.constant 0.000000e+00 : f32
    %82 = vector.broadcast %cst_35 : f32 to vector<192x128xf32>
    %83 = arith.maximumf %81, %82 : vector<192x128xf32>
    %84 = vector.shape_cast %83 : vector<192x128xf32> to vector<12x16x128xf32>
    %cst_36 = arith.constant dense<0xFF800000> : vector<16x128xf32>
    %85 = vector.multi_reduction <maximumf>, %84, %cst_36 [0] : vector<12x16x128xf32> to vector<16x128xf32>
    %86 = tpu.concatenate %24, %52, %85 in 1 : vector<16x128xf32>, vector<16x128xf32>, vector<16x128xf32> -> vector<16x384xf32>
    %c0_37 = arith.constant 0 : index
    %c0_38 = arith.constant 0 : index
    %87 = vector.load %arg4[%c0_37, %c0_38] : memref<384x128xf32, #tpu.memory_space<vmem>>, vector<384x128xf32>
    %cst_39 = arith.constant dense<0.000000e+00> : vector<16x128xf32>
    %88 = tpu.matmul %86, %87, %cst_39 {dimension_numbers = #tpu.dot_dimension_numbers<[1], [0], [0], [1], [0, 0, 1, 1], [], []>} : vector<16x384xf32>, vector<384x128xf32>, vector<16x128xf32> -> vector<16x128xf32>
    %c0_40 = arith.constant 0 : index
    %c0_41 = arith.constant 0 : index
    %89 = vector.load %arg5[%c0_40, %c0_41] : memref<1x128xf32, #tpu.memory_space<vmem>>, vector<1x128xf32>
    %90 = vector.broadcast %89 : vector<1x128xf32> to vector<16x128xf32>
    %91 = arith.addf %88, %90 : vector<16x128xf32>
    %c0_42 = arith.constant 0 : index
    %c0_43 = arith.constant 0 : index
    %92 = vector.load %arg6[%c0_42, %c0_43] : memref<16x128xf32, #tpu.memory_space<vmem>>, vector<16x128xf32>
    tpu.vector_store %arg6[%c0_42, %c0_43], %91 {strides = array<i32>} : memref<16x128xf32, #tpu.memory_space<vmem>>, vector<16x128xf32>,
    return
  }
  func.func @transform_0(%arg0: i32) -> (i32, i32, i32) {
    %c0_i32 = arith.constant 0 : i32
    %c0_i32_0 = arith.constant 0 : i32
    %c0_i32_1 = arith.constant 0 : i32
    return %c0_i32, %arg0, %c0_i32_0 : i32, i32, i32
  }
  func.func @transform_1(%arg0: i32) -> (i32, i32) {
    %c0_i32 = arith.constant 0 : i32
    %c0_i32_0 = arith.constant 0 : i32
    %c0_i32_1 = arith.constant 0 : i32
    return %c0_i32, %c0_i32_0 : i32, i32
  }
  func.func @transform_2(%arg0: i32) -> (i32, i32) {
    %c0_i32 = arith.constant 0 : i32
    %c0_i32_0 = arith.constant 0 : i32
    %c0_i32_1 = arith.constant 0 : i32
    return %c0_i32, %c0_i32_0 : i32, i32
  }
  func.func @transform_3(%arg0: i32) -> (i32, i32) {
    %c0_i32 = arith.constant 0 : i32
    %c0_i32_0 = arith.constant 0 : i32
    %c0_i32_1 = arith.constant 0 : i32
    return %c0_i32, %c0_i32_0 : i32, i32
  }
  func.func @transform_4(%arg0: i32) -> (i32, i32) {
    %c0_i32 = arith.constant 0 : i32
    %c0_i32_0 = arith.constant 0 : i32
    %c0_i32_1 = arith.constant 0 : i32
    return %c0_i32, %c0_i32_0 : i32, i32
  }
  func.func @transform_5(%arg0: i32) -> (i32, i32) {
    %c0_i32 = arith.constant 0 : i32
    %c0_i32_0 = arith.constant 0 : i32
    return %arg0, %c0_i32 : i32, i32
  }
}

</mosaic_0001>

<llo_original>
// kernel: tpu_custom_call.1
$region0: #{tpu_custom_call.1}
  #allocation0 [shape = 'u32[]', space=smem, size = 0x4, offset = 0x4, fixed_abs, tag = 'smem constant byte address 0x4 - core index']
  #allocation1 [shape = 'u32[144,128]{1,0:T(1,128)}', space=vmem, size = 0x12000, scoped, tag = 'internal scratch']
  %s0 = inlined_call_operand.hbm [shape: bf16[16,16,32], index: 0, kind: input, shape index: {}]
  %s1 = inlined_call_operand.hbm [shape: bf16[384,128], index: 1, kind: input, shape index: {}]
  %s2 = inlined_call_operand.hbm [shape: f32[3,128], index: 2, kind: input, shape index: {}]
  %s3 = inlined_call_operand.hbm [shape: f32[384,128], index: 3, kind: input, shape index: {}]
  %s4 = inlined_call_operand.vmem [shape: f32[1,128], index: 4, kind: input, shape index: {}]
  %s5 = inlined_call_operand.hbm [shape: f32[16,128], index: 5, kind: output, shape index: {}]
  %s6 = sld [smem:[#allocation0]]
  $region46: #{tpu_custom_call.1} parent=0
    _
  %s8 = ssub.s32 1, %s6
  %s9 = scalar_select 0, %s8, %s6
  $region1: #{tpu_custom_call.1} parent=0
    #allocation2 [shape = 'u8[65536]{0}', space=vmem, size = 0x10000, scoped, tag = 'input window, operand 0, single buffered']
    #allocation3 [shape = 's32[1]{0}', space=sflag, size = 0x4, scoped, tag = 'scoped memory for tpu_custom_call.1']
    #allocation4 [shape = 's32[1]{0}', space=sflag, size = 0x4, scoped, tag = 'scoped memory for tpu_custom_call.1']
    #allocation5 [shape = 'u8[98304]{0}', space=vmem, size = 0x18000, scoped, tag = 'input window, operand 1, single buffered']
    #allocation6 [shape = 's32[1]{0}', space=sflag, size = 0x4, scoped, tag = 'scoped memory for tpu_custom_call.1']
    #allocation7 [shape = 'u8[2048]{0}', space=vmem, size = 0x800, scoped, tag = 'input window, operand 2, single buffered']
    #allocation8 [shape = 'u8[196608]{0}', space=vmem, size = 0x30000, scoped, tag = 'input window, operand 3, single buffered']
    #allocation9 [shape = 's32[1]{0}', space=sflag, size = 0x4, scoped, tag = 'scoped memory for tpu_custom_call.1']
    #allocation10 [shape = 'u8[8192]{0}', space=vmem, size = 0x2000, scoped, tag = 'output window, operand 0, single buffered']
    %10 = vsyncpa [#allocation3], 0
    %11 = vsyncpa [#allocation6], 0
    %12 = vsyncpa [#allocation9], 0
    %13 = vsyncpa [#allocation4], 0
    // Predicated region
    $region2: #{tpu_custom_call.1} parent=1 // pred_check
      _
    $region3: #{tpu_custom_call.1} parent=1 // pred_check_branch
      %15 = sbr.rel (0) target = $region5
    $region4: #{tpu_custom_call.1} parent=1 // pred_region
      %s17 = ssub.s32 2048, 2048
      %18 = vsyncadd [#allocation3], %s17
      %s19 = sshll.u32 [#allocation2], 4
      %s20 = int_to_ptr.vmem [resolvable:$true] %s19
      %25 = dma.hbm_to_vmem [thread:$0]  %s0, 2048, %s20, [#allocation3], 64, 64, 4
    $region5: #{tpu_custom_call.1} parent=1 // pred_fallthru
      _
    // Predicated region
    $region6: #{tpu_custom_call.1} parent=1 // pred_check
      _
    $region7: #{tpu_custom_call.1} parent=1 // pred_check_branch
      %27 = sbr.rel (0) target = $region9
    $region8: #{tpu_custom_call.1} parent=1 // pred_region
      %s29 = ssub.s32 3072, 3072
      %30 = vsyncadd [#allocation6], %s29
      %s31 = sshll.u32 [#allocation5], 4
      %s32 = int_to_ptr.vmem [resolvable:$true] %s31
      %37 = dma.hbm_to_vmem [thread:$0]  %s1, 3072, %s32, [#allocation6], 64, 64, 4
    $region9: #{tpu_custom_call.1} parent=1 // pred_fallthru
      _
    // Predicated region
    $region10: #{tpu_custom_call.1} parent=1 // pred_check
      _
    $region11: #{tpu_custom_call.1} parent=1 // pred_check_branch
      %39 = sbr.rel (0) target = $region13
    $region12: #{tpu_custom_call.1} parent=1 // pred_region
      %s41 = ssub.s32 64, 64
      %42 = vsyncadd [#allocation6], %s41
      %s44 = sshll.u32 [#allocation7], 4
      %s45 = int_to_ptr.vmem [resolvable:$true] %s44
      %47 = dma.hbm_to_vmem [thread:$0]  %s2, 64, %s45, [#allocation6]
    $region13: #{tpu_custom_call.1} parent=1 // pred_fallthru
      _
    // Predicated region
    $region14: #{tpu_custom_call.1} parent=1 // pred_check
      _
    $region15: #{tpu_custom_call.1} parent=1 // pred_check_branch
      %49 = sbr.rel (0) target = $region17
    $region16: #{tpu_custom_call.1} parent=1 // pred_region
      %s51 = ssub.s32 6144, 6144
      %52 = vsyncadd [#allocation9], %s51
      %s53 = sshll.u32 [#allocation8], 4
      %s54 = int_to_ptr.vmem [resolvable:$true] %s53
      %59 = dma.hbm_to_vmem [thread:$0]  %s3, 6144, %s54, [#allocation9], 128, 128, 8
    $region17: #{tpu_custom_call.1} parent=1 // pred_fallthru
      _
    // Predicated region
    $region18: #{tpu_custom_call.1} parent=1 // pred_check
      _
    $region19: #{tpu_custom_call.1} parent=1 // pred_check_branch
      %61 = sbr.rel (0) target = $region21
    $region20: #{tpu_custom_call.1} parent=1 // pred_region
      _
    $region21: #{tpu_custom_call.1} parent=1 // pred_fallthru
      _
    // Predicated region
    $region22: #{tpu_custom_call.1} parent=1 // pred_check
      _
    $region23: #{tpu_custom_call.1} parent=1 // pred_check_branch
      %63 = sbr.rel (0) target = $region25
    $region24: #{tpu_custom_call.1} parent=1 // pred_region
      %64 = dma.done [#allocation3], 2048
    $region25: #{tpu_custom_call.1} parent=1 // pred_fallthru
      _
    // Predicated region
    $region26: #{tpu_custom_call.1} parent=1 // pred_check
      _
    $region27: #{tpu_custom_call.1} parent=1 // pred_check_branch
      %66 = sbr.rel (0) target = $region29
    $region28: #{tpu_custom_call.1} parent=1 // pred_region
      %67 = dma.done [#allocation6], 3072
    $region29: #{tpu_custom_call.1} parent=1 // pred_fallthru
      _
    // Predicated region
    $region30: #{tpu_custom_call.1} parent=1 // pred_check
      _
    $region31: #{tpu_custom_call.1} parent=1 // pred_check_branch
      %69 = sbr.rel (0) target = $region33
    $region32: #{tpu_custom_call.1} parent=1 // pred_region
      %70 = dma.done [#allocation6], 64
    $region33: #{tpu_custom_call.1} parent=1 // pred_fallthru
      _
    // Predicated region
    $region34: #{tpu_custom_call.1} parent=1 // pred_check
      _
    $region35: #{tpu_custom_call.1} parent=1 // pred_check_branch
      %72 = sbr.rel (0) target = $region37
    $region36: #{tpu_custom_call.1} parent=1 // pred_region
      %73 = dma.done [#allocation9], 6144
    $region37: #{tpu_custom_call.1} parent=1 // pred_fallthru
      _
    %v75 = vld [vmem:[#allocation2] sm:$0xf]
    %v76 = vld [vmem:[#allocation2 + $0x4] sm:$0xf]
    %v77 = vld [vmem:[#allocation2 + $0x8] sm:$0xf]
    %v78 = vld [vmem:[#allocation2 + $0xc] sm:$0xf]
    %v79 = vld [vmem:[#allocation2 + $0x10] sm:$0xf]
    %v80 = vld [vmem:[#allocation2 + $0x14] sm:$0xf]
    %v81 = vld [vmem:[#allocation2 + $0x18] sm:$0xf]
    %v82 = vld [vmem:[#allocation2 + $0x1c] sm:$0xf]
    %v83 = vld [vmem:[#allocation2 + $0x20] sm:$0xf]
    %v84 = vld [vmem:[#allocation2 + $0x24] sm:$0xf]
    %v85 = vld [vmem:[#allocation2 + $0x28] sm:$0xf]
    %v86 = vld [vmem:[#allocation2 + $0x2c] sm:$0xf]
    %v87 = vld [vmem:[#allocation2 + $0x30] sm:$0xf]
    %v88 = vld [vmem:[#allocation2 + $0x34] sm:$0xf]
    %v89 = vld [vmem:[#allocation2 + $0x38] sm:$0xf]
    %v90 = vld [vmem:[#allocation2 + $0x3c] sm:$0xf]
    %v91 = vld [vmem:[#allocation2 + $0x40] sm:$0xf]
    %v92 = vld [vmem:[#allocation2 + $0x44] sm:$0xf]
    %v93 = vld [vmem:[#allocation2 + $0x48] sm:$0xf]
    %v94 = vld [vmem:[#allocation2 + $0x4c] sm:$0xf]
    %v95 = vld [vmem:[#allocation2 + $0x50] sm:$0xf]
    %v96 = vld [vmem:[#allocation2 + $0x54] sm:$0xf]
    %v97 = vld [vmem:[#allocation2 + $0x58] sm:$0xf]
    %v98 = vld [vmem:[#allocation2 + $0x5c] sm:$0xf]
    %v99 = vld [vmem:[#allocation2 + $0x60] sm:$0xf]
    %v100 = vld [vmem:[#allocation2 + $0x64] sm:$0xf]
    %v101 = vld [vmem:[#allocation2 + $0x68] sm:$0xf]
    %v102 = vld [vmem:[#allocation2 + $0x6c] sm:$0xf]
    %v103 = vld [vmem:[#allocation2 + $0x70] sm:$0xf]
    %v104 = vld [vmem:[#allocation2 + $0x74] sm:$0xf]
    %v105 = vld [vmem:[#allocation2 + $0x78] sm:$0xf]
    %v106 = vld [vmem:[#allocation2 + $0x7c] sm:$0xf]
    %v107 = vld [vmem:[#allocation7] sm:$0x7]
    %v108 = vld [vmem:[#allocation5] sm:$0xf]
    %v109 = vld [vmem:[#allocation5 + $0x4] sm:$0xf]
    %v110 = vld [vmem:[#allocation5 + $0x8] sm:$0xf]
    %v111 = vld [vmem:[#allocation5 + $0xc] sm:$0xf]
    %v112 = vld [vmem:[#allocation5 + $0x10] sm:$0xf]
    %v113 = vld [vmem:[#allocation5 + $0x14] sm:$0xf]
    %v114 = vld [vmem:[#allocation5 + $0x18] sm:$0xf]
    %v115 = vld [vmem:[#allocation5 + $0x1c] sm:$0xf]
    %v144 = vunpack.c.l.b16 %v77
    %v145 = vunpack.c.l.b16 %v78
    %v146 = vunpack.c.l.b16 %v79
    %v147 = vunpack.c.l.b16 %v80
    %v148 = vunpack.c.l.b16 %v81
    %v149 = vunpack.c.l.b16 %v82
    %v150 = vunpack.c.l.b16 %v83
    %v151 = vunpack.c.l.b16 %v84
    %v152 = vunpack.c.l.b16 %v85
    %v153 = vunpack.c.l.b16 %v86
    %v154 = vunpack.c.l.b16 %v87
    %v155 = vunpack.c.l.b16 %v88
    %v156 = vunpack.c.l.b16 %v89
    %v157 = vunpack.c.l.b16 %v90
    %v158 = vunpack.c.l.b16 %v91
    %v159 = vunpack.c.l.b16 %v92
    %v160 = vunpack.c.l.b16 %v93
    %v161 = vunpack.c.l.b16 %v94
    %v162 = vunpack.c.l.b16 %v95
    %v163 = vunpack.c.l.b16 %v96
    %v164 = vunpack.c.l.b16 %v97
    %v165 = vunpack.c.l.b16 %v98
    %v166 = vunpack.c.l.b16 %v99
    %v167 = vunpack.c.l.b16 %v100
    %v168 = vunpack.c.l.b16 %v101
    %v169 = vunpack.c.l.b16 %v102
    %v170 = vunpack.c.l.b16 %v103
    %v171 = vunpack.c.l.b16 %v104
    %v172 = vpack.c.b16 %v145, %v144
    %v173 = vpack.c.b16 %v147, %v146
    %v174 = vpack.c.b16 %v149, %v148
    %v175 = vpack.c.b16 %v151, %v150
    %v176 = vpack.c.b16 %v153, %v152
    %v177 = vpack.c.b16 %v155, %v154
    %v178 = vpack.c.b16 %v157, %v156
    %v179 = vpack.c.b16 %v159, %v158
    %v180 = vpack.c.b16 %v161, %v160
    %v181 = vpack.c.b16 %v163, %v162
    %v182 = vpack.c.b16 %v165, %v164
    %v183 = vpack.c.b16 %v167, %v166
    %v184 = vpack.c.b16 %v169, %v168
    %v185 = vpack.c.b16 %v171, %v170
    %v190 = vunpack.c.l.b16 %v112
    %v191 = vunpack.c.l.b16 %v113
    %v192 = vunpack.c.l.b16 %v114
    %v193 = vunpack.c.l.b16 %v115
    %v194 = vpack.c.b16 %v191, %v190
    %v195 = vpack.c.b16 %v193, %v192
    %vm198 = vcmask 261120
    %v200 = vsel %vm198, %v172, 0
    %v203 = vsel %vm198, %v173, 0
    %v206 = vsel %vm198, %v174, 0
    %v209 = vsel %vm198, %v175, 0
    %v212 = vsel %vm198, %v176, 0
    %v215 = vsel %vm198, %v177, 0
    %v218 = vsel %vm198, %v178, 0
    %v221 = vsel %vm198, %v179, 0
    %v224 = vsel %vm198, %v180, 0
    %v227 = vsel %vm198, %v181, 0
    %v230 = vsel %vm198, %v182, 0
    %v233 = vsel %vm198, %v183, 0
    %v236 = vsel %vm198, %v184, 0
    %v239 = vsel %vm198, %v185, 0
    %241 = vmatprep.subr.bf16.mxu0 0
    %242 = vmatpush1.bf16.msra.mxu0 0
    %243 = vmatprep.subr.bf16.mxu0 0
    %244 = vmatpush1.bf16.msra.mxu0 0
    %245 = vmatprep.subr.bf16.mxu0 0
    %246 = vmatpush1.bf16.msra.mxu0 0
    %247 = vmatprep.subr.bf16.mxu0 0
    %248 = vmatpush1.bf16.msra.mxu0 0
    %249 = vmatprep.subr.bf16.mxu0 0
    %250 = vmatpush1.bf16.msra.mxu0 0
    %251 = vmatprep.subr.bf16.mxu0 0
    %252 = vmatpush1.bf16.msra.mxu0 0
    %253 = vmatprep.subr.bf16.mxu0 0
    %254 = vmatpush1.bf16.msra.mxu0 %v195
    %255 = vmatprep.subr.bf16.mxu0 0
    %256 = vmatpush1.bf16.msra.mxu0 %v194
    %257 = vmatprep.subr.bf16.mxu0 0
    %258 = vmatpush2.bf16.msra.mxu0 0
    %259 = vmatprep.subr.bf16.mxu0 0
    %260 = vmatpush2.bf16.msra.mxu0 0
    %261 = vmatprep.subr.bf16.mxu0 0
    %262 = vmatpush2.bf16.msra.mxu0 0
    %263 = vmatprep.subr.bf16.mxu0 0
    %264 = vmatpush2.bf16.msra.mxu0 0
    %265 = vmatprep.subr.bf16.mxu0 0
    %266 = vmatpush2.bf16.msra.mxu0 0
    %267 = vmatprep.subr.bf16.mxu0 0
    %268 = vmatpush2.bf16.msra.mxu0 0
    %269 = vmatprep.subr.bf16.mxu0 0
    %270 = vmatpush2.bf16.msra.mxu0 0
    %271 = vmatprep.subr.bf16.mxu0 0
    %272 = vmatpush2.bf16.msra.mxu0 0
    %273 = vmatprep.mubr.bf16.mxu0 0
    %274 = vmatmul.mubr.bf16.gmra.mxu0 %v200
    %v275 = vpop.f32.mrf.mxu0
    %v276 = vadd.f32 0.0, %v275
    %v277 = vpop.f32.mrf.mxu0
    %v278 = vpop.f32.mrf.mxu0
    %v279 = vadd.f32 0.0, %v278
    %v280 = vpop.f32.mrf.mxu0
    %281 = vmatprep.mubr.bf16.mxu0 0
    %282 = vmatmul.mubr.bf16.gmra.mxu0 %v203
    %v283 = vpop.f32.mrf.mxu0
    %v284 = vadd.f32 0.0, %v283
    %v285 = vpop.f32.mrf.mxu0
    %v286 = vpop.f32.mrf.mxu0
    %v287 = vadd.f32 0.0, %v286
    %v288 = vpop.f32.mrf.mxu0
    %289 = vmatprep.mubr.bf16.mxu0 0
    %290 = vmatmul.mubr.bf16.gmra.mxu0 %v206
    %v291 = vpop.f32.mrf.mxu0
    %v292 = vadd.f32 0.0, %v291
    %v293 = vpop.f32.mrf.mxu0
    %v294 = vpop.f32.mrf.mxu0
    %v295 = vadd.f32 0.0, %v294
    %v296 = vpop.f32.mrf.mxu0
    %297 = vmatprep.mubr.bf16.mxu0 0
    %298 = vmatmul.mubr.bf16.gmra.mxu0 %v209
    %v299 = vpop.f32.mrf.mxu0
    %v300 = vadd.f32 0.0, %v299
    %v301 = vpop.f32.mrf.mxu0
    %v302 = vpop.f32.mrf.mxu0
    %v303 = vadd.f32 0.0, %v302
    %v304 = vpop.f32.mrf.mxu0
    %305 = vmatprep.mubr.bf16.mxu0 0
    %306 = vmatmul.mubr.bf16.gmra.mxu0 %v212
    %v307 = vpop.f32.mrf.mxu0
    %v308 = vadd.f32 0.0, %v307
    %v309 = vpop.f32.mrf.mxu0
    %v310 = vpop.f32.mrf.mxu0
    %v311 = vadd.f32 0.0, %v310
    %v312 = vpop.f32.mrf.mxu0
    %313 = vmatprep.mubr.bf16.mxu0 0
    %314 = vmatmul.mubr.bf16.gmra.mxu0 %v215
    %v315 = vpop.f32.mrf.mxu0
    %v316 = vadd.f32 0.0, %v315
    %v317 = vpop.f32.mrf.mxu0
    %v318 = vpop.f32.mrf.mxu0
    %v319 = vadd.f32 0.0, %v318
    %v320 = vpop.f32.mrf.mxu0
    %321 = vmatprep.mubr.bf16.mxu0 0
    %322 = vmatmul.mubr.bf16.gmra.mxu0 %v218
    %v323 = vpop.f32.mrf.mxu0
    %v324 = vadd.f32 0.0, %v323
    %v325 = vpop.f32.mrf.mxu0
    %v326 = vpop.f32.mrf.mxu0
    %v327 = vadd.f32 0.0, %v326
    %v328 = vpop.f32.mrf.mxu0
    %329 = vmatprep.mubr.bf16.mxu0 0
    %330 = vmatmul.mubr.bf16.gmra.mxu0 %v221
    %v331 = vpop.f32.mrf.mxu0
    %v332 = vadd.f32 0.0, %v331
    %v333 = vpop.f32.mrf.mxu0
    %v334 = vpop.f32.mrf.mxu0
    %v335 = vadd.f32 0.0, %v334
    %v336 = vpop.f32.mrf.mxu0
    %337 = vmatprep.mubr.bf16.mxu0 0
    %338 = vmatmul.mubr.bf16.gmra.mxu0 %v224
    %v339 = vpop.f32.mrf.mxu0
    %v340 = vadd.f32 0.0, %v339
    %v341 = vpop.f32.mrf.mxu0
    %v342 = vpop.f32.mrf.mxu0
    %v343 = vadd.f32 0.0, %v342
    %v344 = vpop.f32.mrf.mxu0
    %345 = vmatprep.mubr.bf16.mxu0 0
    %346 = vmatmul.mubr.bf16.gmra.mxu0 %v227
    %v347 = vpop.f32.mrf.mxu0
    %v348 = vadd.f32 0.0, %v347
    %v349 = vpop.f32.mrf.mxu0
    %v350 = vpop.f32.mrf.mxu0
    %v351 = vadd.f32 0.0, %v350
    %v352 = vpop.f32.mrf.mxu0
    %353 = vmatprep.mubr.bf16.mxu0 0
    %354 = vmatmul.mubr.bf16.gmra.mxu0 %v230
    %v355 = vpop.f32.mrf.mxu0
    %v356 = vadd.f32 0.0, %v355
    %v357 = vpop.f32.mrf.mxu0
    %v358 = vpop.f32.mrf.mxu0
    %v359 = vadd.f32 0.0, %v358
    %v360 = vpop.f32.mrf.mxu0
    %361 = vmatprep.mubr.bf16.mxu0 0
    %362 = vmatmul.mubr.bf16.gmra.mxu0 %v233
    %v363 = vpop.f32.mrf.mxu0
    %v364 = vadd.f32 0.0, %v363
    %v365 = vpop.f32.mrf.mxu0
    %v366 = vpop.f32.mrf.mxu0
    %v367 = vadd.f32 0.0, %v366
    %v368 = vpop.f32.mrf.mxu0
    %369 = vmatprep.mubr.bf16.mxu0 0
    %370 = vmatmul.mubr.bf16.gmra.mxu0 %v236
    %v371 = vpop.f32.mrf.mxu0
    %v372 = vadd.f32 0.0, %v371
    %v373 = vpop.f32.mrf.mxu0
    %v374 = vpop.f32.mrf.mxu0
    %v375 = vadd.f32 0.0, %v374
    %v376 = vpop.f32.mrf.mxu0
    %377 = vmatprep.mubr.bf16.mxu0 0
    %378 = vmatmul.mubr.bf16.gmra.mxu0 %v239
    %v379 = vpop.f32.mrf.mxu0
    %v380 = vadd.f32 0.0, %v379
    %v381 = vpop.f32.mrf.mxu0
    %v382 = vpop.f32.mrf.mxu0
    %v383 = vadd.f32 0.0, %v382
    %v384 = vpop.f32.mrf.mxu0
    %385 = vdwg.mxu0
    %v388 = vunpack.c.l.b16 %v75
    %v389 = vunpack.c.l.b16 %v76
    %v390 = vpack.c.b16 %v389, %v388
    %v395 = vunpack.c.l.b16 %v108
    %v396 = vunpack.c.l.b16 %v109
    %v397 = vunpack.c.l.b16 %v110
    %v398 = vunpack.c.l.b16 %v111
    %v399 = vpack.c.b16 %v396, %v395
    %v400 = vpack.c.b16 %v398, %v397
    %v404 = vsel %vm198, %v390, 0
    %406 = vmatprep.subr.bf16.mxu0 0
    %407 = vmatpush1.bf16.msra.mxu0 0
    %408 = vmatprep.subr.bf16.mxu0 0
    %409 = vmatpush1.bf16.msra.mxu0 0
    %410 = vmatprep.subr.bf16.mxu0 0
    %411 = vmatpush1.bf16.msra.mxu0 0
    %412 = vmatprep.subr.bf16.mxu0 0
    %413 = vmatpush1.bf16.msra.mxu0 0
    %414 = vmatprep.subr.bf16.mxu0 0
    %415 = vmatpush1.bf16.msra.mxu0 0
    %416 = vmatprep.subr.bf16.mxu0 0
    %417 = vmatpush1.bf16.msra.mxu0 0
    %418 = vmatprep.subr.bf16.mxu0 0
    %419 = vmatpush1.bf16.msra.mxu0 %v400
    %420 = vmatprep.subr.bf16.mxu0 0
    %421 = vmatpush1.bf16.msra.mxu0 %v399
    %422 = vmatprep.subr.bf16.mxu0 0
    %423 = vmatpush2.bf16.msra.mxu0 0
    %424 = vmatprep.subr.bf16.mxu0 0
    %425 = vmatpush2.bf16.msra.mxu0 0
    %426 = vmatprep.subr.bf16.mxu0 0
    %427 = vmatpush2.bf16.msra.mxu0 0
    %428 = vmatprep.subr.bf16.mxu0 0
    %429 = vmatpush2.bf16.msra.mxu0 0
    %430 = vmatprep.subr.bf16.mxu0 0
    %431 = vmatpush2.bf16.msra.mxu0 0
    %432 = vmatprep.subr.bf16.mxu0 0
    %433 = vmatpush2.bf16.msra.mxu0 0
    %434 = vmatprep.subr.bf16.mxu0 0
    %435 = vmatpush2.bf16.msra.mxu0 0
    %436 = vmatprep.subr.bf16.mxu0 0
    %437 = vmatpush2.bf16.msra.mxu0 0
    %438 = vmatprep.mubr.bf16.mxu0 0
    %439 = vmatmul.mubr.bf16.gmra.mxu0 %v404
    %v440 = vpop.f32.mrf.mxu0
    %v441 = vadd.f32 %v276, %v440
    %v442 = vpop.f32.mrf.mxu0
    %v443 = vpop.f32.mrf.mxu0
    %v444 = vadd.f32 %v279, %v443
    %v445 = vpop.f32.mrf.mxu0
    %446 = vmatprep.mubr.bf16.mxu0 0
    %447 = vmatmul.mubr.bf16.gmra.mxu0 %v200
    %v448 = vpop.f32.mrf.mxu0
    %v449 = vadd.f32 %v284, %v448
    %v450 = vpop.f32.mrf.mxu0
    %v451 = vpop.f32.mrf.mxu0
    %v452 = vadd.f32 %v287, %v451
    %v453 = vpop.f32.mrf.mxu0
    %454 = vmatprep.mubr.bf16.mxu0 0
    %455 = vmatmul.mubr.bf16.gmra.mxu0 %v203
    %v456 = vpop.f32.mrf.mxu0
    %v457 = vadd.f32 %v292, %v456
    %v458 = vpop.f32.mrf.mxu0
    %v459 = vpop.f32.mrf.mxu0
    %v460 = vadd.f32 %v295, %v459
    %v461 = vpop.f32.mrf.mxu0
    %462 = vmatprep.mubr.bf16.mxu0 0
    %463 = vmatmul.mubr.bf16.gmra.mxu0 %v206
    %v464 = vpop.f32.mrf.mxu0
    %v465 = vadd.f32 %v300, %v464
    %v466 = vpop.f32.mrf.mxu0
    %v467 = vpop.f32.mrf.mxu0
    %v468 = vadd.f32 %v303, %v467
    %v469 = vpop.f32.mrf.mxu0
    %470 = vmatprep.mubr.bf16.mxu0 0
    %471 = vmatmul.mubr.bf16.gmra.mxu0 %v209
    %v472 = vpop.f32.mrf.mxu0
    %v473 = vadd.f32 %v308, %v472
    %v474 = vpop.f32.mrf.mxu0
    %v475 = vpop.f32.mrf.mxu0
    %v476 = vadd.f32 %v311, %v475
    %v477 = vpop.f32.mrf.mxu0
    %478 = vmatprep.mubr.bf16.mxu0 0
    %479 = vmatmul.mubr.bf16.gmra.mxu0 %v212
    %v480 = vpop.f32.mrf.mxu0
    %v481 = vadd.f32 %v316, %v480
    %v482 = vpop.f32.mrf.mxu0
    %v483 = vpop.f32.mrf.mxu0
    %v484 = vadd.f32 %v319, %v483
    %v485 = vpop.f32.mrf.mxu0
    %486 = vmatprep.mubr.bf16.mxu0 0
    %487 = vmatmul.mubr.bf16.gmra.mxu0 %v215
    %v488 = vpop.f32.mrf.mxu0
    %v489 = vadd.f32 %v324, %v488
    %v490 = vpop.f32.mrf.mxu0
    %v491 = vpop.f32.mrf.mxu0
    %v492 = vadd.f32 %v327, %v491
    %v493 = vpop.f32.mrf.mxu0
    %494 = vmatprep.mubr.bf16.mxu0 0
    %495 = vmatmul.mubr.bf16.gmra.mxu0 %v218
    %v496 = vpop.f32.mrf.mxu0
    %v497 = vadd.f32 %v332, %v496
    %v498 = vpop.f32.mrf.mxu0
    %v499 = vpop.f32.mrf.mxu0
    %v500 = vadd.f32 %v335, %v499
    %v501 = vpop.f32.mrf.mxu0
    %502 = vmatprep.mubr.bf16.mxu0 0
    %503 = vmatmul.mubr.bf16.gmra.mxu0 %v221
    %v504 = vpop.f32.mrf.mxu0
    %v505 = vadd.f32 %v340, %v504
    %v506 = vpop.f32.mrf.mxu0
    %v507 = vpop.f32.mrf.mxu0
    %v508 = vadd.f32 %v343, %v507
    %v509 = vpop.f32.mrf.mxu0
    %510 = vmatprep.mubr.bf16.mxu0 0
    %511 = vmatmul.mubr.bf16.gmra.mxu0 %v224
    %v512 = vpop.f32.mrf.mxu0
    %v513 = vadd.f32 %v348, %v512
    %v514 = vpop.f32.mrf.mxu0
    %v515 = vpop.f32.mrf.mxu0
    %v516 = vadd.f32 %v351, %v515
    %v517 = vpop.f32.mrf.mxu0
    %518 = vmatprep.mubr.bf16.mxu0 0
    %519 = vmatmul.mubr.bf16.gmra.mxu0 %v227
    %v520 = vpop.f32.mrf.mxu0
    %v521 = vadd.f32 %v356, %v520
    %v522 = vpop.f32.mrf.mxu0
    %v523 = vpop.f32.mrf.mxu0
    %v524 = vadd.f32 %v359, %v523
    %v525 = vpop.f32.mrf.mxu0
    %526 = vmatprep.mubr.bf16.mxu0 0
    %527 = vmatmul.mubr.bf16.gmra.mxu0 %v230
    %v528 = vpop.f32.mrf.mxu0
    %v529 = vadd.f32 %v364, %v528
    %v530 = vpop.f32.mrf.mxu0
    %v531 = vpop.f32.mrf.mxu0
    %v532 = vadd.f32 %v367, %v531
    %v533 = vpop.f32.mrf.mxu0
    %534 = vmatprep.mubr.bf16.mxu0 0
    %535 = vmatmul.mubr.bf16.gmra.mxu0 %v233
    %v536 = vpop.f32.mrf.mxu0
    %v537 = vadd.f32 %v372, %v536
    %v538 = vpop.f32.mrf.mxu0
    %v539 = vpop.f32.mrf.mxu0
    %v540 = vadd.f32 %v375, %v539
    %v541 = vpop.f32.mrf.mxu0
    %542 = vmatprep.mubr.bf16.mxu0 0
    %543 = vmatmul.mubr.bf16.gmra.mxu0 %v236
    %v544 = vpop.f32.mrf.mxu0
    %v545 = vadd.f32 %v380, %v544
    %v546 = vpop.f32.mrf.mxu0
    %v547 = vpop.f32.mrf.mxu0
    %v548 = vadd.f32 %v383, %v547
    %v549 = vpop.f32.mrf.mxu0
    %550 = vdwg.mxu0
    %v551 = vld [vmem:[#allocation5 + $0x20] sm:$0xf]
    %v552 = vld [vmem:[#allocation5 + $0x24] sm:$0xf]
    %v553 = vld [vmem:[#allocation5 + $0x28] sm:$0xf]
    %v554 = vld [vmem:[#allocation5 + $0x2c] sm:$0xf]
    %v557 = vunpack.c.l.b16 %v105
    %v558 = vunpack.c.l.b16 %v106
    %v559 = vpack.c.b16 %v558, %v557
    %v564 = vunpack.c.l.b16 %v551
    %v565 = vunpack.c.l.b16 %v552
    %v566 = vunpack.c.l.b16 %v553
    %v567 = vunpack.c.l.b16 %v554
    %v568 = vpack.c.b16 %v565, %v564
    %v569 = vpack.c.b16 %v567, %v566
    %v573 = vsel %vm198, %v559, 0
    %575 = vmatprep.subr.bf16.mxu0 0
    %576 = vmatpush1.bf16.msra.mxu0 0
    %577 = vmatprep.subr.bf16.mxu0 0
    %578 = vmatpush1.bf16.msra.mxu0 0
    %579 = vmatprep.subr.bf16.mxu0 0
    %580 = vmatpush1.bf16.msra.mxu0 0
    %581 = vmatprep.subr.bf16.mxu0 0
    %582 = vmatpush1.bf16.msra.mxu0 0
    %583 = vmatprep.subr.bf16.mxu0 0
    %584 = vmatpush1.bf16.msra.mxu0 0
    %585 = vmatprep.subr.bf16.mxu0 0
    %586 = vmatpush1.bf16.msra.mxu0 0
    %587 = vmatprep.subr.bf16.mxu0 0
    %588 = vmatpush1.bf16.msra.mxu0 %v569
    %589 = vmatprep.subr.bf16.mxu0 0
    %590 = vmatpush1.bf16.msra.mxu0 %v568
    %591 = vmatprep.subr.bf16.mxu0 0
    %592 = vmatpush2.bf16.msra.mxu0 0
    %593 = vmatprep.subr.bf16.mxu0 0
    %594 = vmatpush2.bf16.msra.mxu0 0
    %595 = vmatprep.subr.bf16.mxu0 0
    %596 = vmatpush2.bf16.msra.mxu0 0
    %597 = vmatprep.subr.bf16.mxu0 0
    %598 = vmatpush2.bf16.msra.mxu0 0
    %599 = vmatprep.subr.bf16.mxu0 0
    %600 = vmatpush2.bf16.msra.mxu0 0
    %601 = vmatprep.subr.bf16.mxu0 0
    %602 = vmatpush2.bf16.msra.mxu0 0
    %603 = vmatprep.subr.bf16.mxu0 0
    %604 = vmatpush2.bf16.msra.mxu0 0
    %605 = vmatprep.subr.bf16.mxu0 0
    %606 = vmatpush2.bf16.msra.mxu0 0
    %607 = vmatprep.mubr.bf16.mxu0 0
    %608 = vmatmul.mubr.bf16.gmra.mxu0 %v203
    %v609 = vpop.f32.mrf.mxu0
    %v610 = vadd.f32 0.0, %v609
    %v611 = vpop.f32.mrf.mxu0
    %v612 = vpop.f32.mrf.mxu0
    %v613 = vadd.f32 0.0, %v612
    %v614 = vpop.f32.mrf.mxu0
    %615 = vmatprep.mubr.bf16.mxu0 0
    %616 = vmatmul.mubr.bf16.gmra.mxu0 %v206
    %v617 = vpop.f32.mrf.mxu0
    %v618 = vadd.f32 0.0, %v617
    %v619 = vpop.f32.mrf.mxu0
    %v620 = vpop.f32.mrf.mxu0
    %v621 = vadd.f32 0.0, %v620
    %v622 = vpop.f32.mrf.mxu0
    %623 = vmatprep.mubr.bf16.mxu0 0
    %624 = vmatmul.mubr.bf16.gmra.mxu0 %v209
    %v625 = vpop.f32.mrf.mxu0
    %v626 = vadd.f32 0.0, %v625
    %v627 = vpop.f32.mrf.mxu0
    %v628 = vpop.f32.mrf.mxu0
    %v629 = vadd.f32 0.0, %v628
    %v630 = vpop.f32.mrf.mxu0
    %631 = vmatprep.mubr.bf16.mxu0 0
    %632 = vmatmul.mubr.bf16.gmra.mxu0 %v212
    %v633 = vpop.f32.mrf.mxu0
    %v634 = vadd.f32 0.0, %v633
    %v635 = vpop.f32.mrf.mxu0
    %v636 = vpop.f32.mrf.mxu0
    %v637 = vadd.f32 0.0, %v636
    %v638 = vpop.f32.mrf.mxu0
    %639 = vmatprep.mubr.bf16.mxu0 0
    %640 = vmatmul.mubr.bf16.gmra.mxu0 %v215
    %v641 = vpop.f32.mrf.mxu0
    %v642 = vadd.f32 0.0, %v641
    %v643 = vpop.f32.mrf.mxu0
    %v644 = vpop.f32.mrf.mxu0
    %v645 = vadd.f32 0.0, %v644
    %v646 = vpop.f32.mrf.mxu0
    %647 = vmatprep.mubr.bf16.mxu0 0
    %648 = vmatmul.mubr.bf16.gmra.mxu0 %v218
    %v649 = vpop.f32.mrf.mxu0
    %v650 = vadd.f32 0.0, %v649
    %v651 = vpop.f32.mrf.mxu0
    %v652 = vpop.f32.mrf.mxu0
    %v653 = vadd.f32 0.0, %v652
    %v654 = vpop.f32.mrf.mxu0
    %655 = vmatprep.mubr.bf16.mxu0 0
    %656 = vmatmul.mubr.bf16.gmra.mxu0 %v221
    %v657 = vpop.f32.mrf.mxu0
    %v658 = vadd.f32 0.0, %v657
    %v659 = vpop.f32.mrf.mxu0
    %v660 = vpop.f32.mrf.mxu0
    %v661 = vadd.f32 0.0, %v660
    %v662 = vpop.f32.mrf.mxu0
    %663 = vmatprep.mubr.bf16.mxu0 0
    %664 = vmatmul.mubr.bf16.gmra.mxu0 %v224
    %v665 = vpop.f32.mrf.mxu0
    %v666 = vadd.f32 0.0, %v665
    %v667 = vpop.f32.mrf.mxu0
    %v668 = vpop.f32.mrf.mxu0
    %v669 = vadd.f32 0.0, %v668
    %v670 = vpop.f32.mrf.mxu0
    %671 = vmatprep.mubr.bf16.mxu0 0
    %672 = vmatmul.mubr.bf16.gmra.mxu0 %v227
    %v673 = vpop.f32.mrf.mxu0
    %v674 = vadd.f32 0.0, %v673
    %v675 = vpop.f32.mrf.mxu0
    %v676 = vpop.f32.mrf.mxu0
    %v677 = vadd.f32 0.0, %v676
    %v678 = vpop.f32.mrf.mxu0
    %679 = vmatprep.mubr.bf16.mxu0 0
    %680 = vmatmul.mubr.bf16.gmra.mxu0 %v230
    %v681 = vpop.f32.mrf.mxu0
    %v682 = vadd.f32 0.0, %v681
    %v683 = vpop.f32.mrf.mxu0
    %v684 = vpop.f32.mrf.mxu0
    %v685 = vadd.f32 0.0, %v684
    %v686 = vpop.f32.mrf.mxu0
    %687 = vmatprep.mubr.bf16.mxu0 0
    %688 = vmatmul.mubr.bf16.gmra.mxu0 %v233
    %v689 = vpop.f32.mrf.mxu0
    %v690 = vadd.f32 0.0, %v689
    %v691 = vpop.f32.mrf.mxu0
    %v692 = vpop.f32.mrf.mxu0
    %v693 = vadd.f32 0.0, %v692
    %v694 = vpop.f32.mrf.mxu0
    %695 = vmatprep.mubr.bf16.mxu0 0
    %696 = vmatmul.mubr.bf16.gmra.mxu0 %v236
    %v697 = vpop.f32.mrf.mxu0
    %v698 = vadd.f32 0.0, %v697
    %v699 = vpop.f32.mrf.mxu0
    %v700 = vpop.f32.mrf.mxu0
    %v701 = vadd.f32 0.0, %v700
    %v702 = vpop.f32.mrf.mxu0
    %703 = vmatprep.mubr.bf16.mxu0 0
    %704 = vmatmul.mubr.bf16.gmra.mxu0 %v239
    %v705 = vpop.f32.mrf.mxu0
    %v706 = vadd.f32 0.0, %v705
    %v707 = vpop.f32.mrf.mxu0
    %v708 = vpop.f32.mrf.mxu0
    %v709 = vadd.f32 0.0, %v708
    %v710 = vpop.f32.mrf.mxu0
    %711 = vmatprep.mubr.bf16.mxu0 0
    %712 = vmatmul.mubr.bf16.gmra.mxu0 %v573
    %v713 = vpop.f32.mrf.mxu0
    %v714 = vadd.f32 0.0, %v713
    %v715 = vpop.f32.mrf.mxu0
    %v716 = vpop.f32.mrf.mxu0
    %v717 = vadd.f32 0.0, %v716
    %v718 = vpop.f32.mrf.mxu0
    %719 = vdwg.mxu0
    %v720 = vadd.f32 %v441, %v610
    %v721 = vadd.f32 %v444, %v613
    %v722 = vadd.f32 %v449, %v618
    %v723 = vadd.f32 %v452, %v621
    %v724 = vadd.f32 %v457, %v626
    %v725 = vadd.f32 %v460, %v629
    %v726 = vadd.f32 %v465, %v634
    %v727 = vadd.f32 %v468, %v637
    %v728 = vadd.f32 %v473, %v642
    %v729 = vadd.f32 %v476, %v645
    %v730 = vadd.f32 %v481, %v650
    %v731 = vadd.f32 %v484, %v653
    %v732 = vadd.f32 %v489, %v658
    %v733 = vadd.f32 %v492, %v661
    %v734 = vadd.f32 %v497, %v666
    %v735 = vadd.f32 %v500, %v669
    %v736 = vadd.f32 %v505, %v674
    %v737 = vadd.f32 %v508, %v677
    %v738 = vadd.f32 %v513, %v682
    %v739 = vadd.f32 %v516, %v685
    %v740 = vadd.f32 %v521, %v690
    %v741 = vadd.f32 %v524, %v693
    %v742 = vadd.f32 %v529, %v698
    %v743 = vadd.f32 %v532, %v701
    %v744 = vadd.f32 %v537, %v706
    %v745 = vadd.f32 %v540, %v709
    %v746 = vadd.f32 %v545, %v714
    %v747 = vadd.f32 %v548, %v717
    %v748 = vlaneseq
    %v749 = vshrl.u32 %v748, 7
    %v750 = vsub.s32 0, %v749
    %v751 = vrot.slane %v107, %v750
    %v752 = vadd.f32 %v720, %v751
    %v753 = vadd.f32 %v721, %v751
    %v754 = vadd.f32 %v722, %v751
    %v755 = vadd.f32 %v723, %v751
    %v756 = vadd.f32 %v724, %v751
    %v757 = vadd.f32 %v725, %v751
    %v758 = vadd.f32 %v726, %v751
    %v759 = vadd.f32 %v727, %v751
    %v760 = vadd.f32 %v728, %v751
    %v761 = vadd.f32 %v729, %v751
    %v762 = vadd.f32 %v730, %v751
    %v763 = vadd.f32 %v731, %v751
    %v764 = vadd.f32 %v732, %v751
    %v765 = vadd.f32 %v733, %v751
    %v766 = vadd.f32 %v734, %v751
    %v767 = vadd.f32 %v735, %v751
    %v768 = vadd.f32 %v736, %v751
    %v769 = vadd.f32 %v737, %v751
    %v770 = vadd.f32 %v738, %v751
    %v771 = vadd.f32 %v739, %v751
    %v772 = vadd.f32 %v740, %v751
    %v773 = vadd.f32 %v741, %v751
    %v774 = vadd.f32 %v742, %v751
    %v775 = vadd.f32 %v743, %v751
    %v776 = vadd.f32 %v744, %v751
    %v777 = vadd.f32 %v745, %v751
    %v778 = vadd.f32 %v746, %v751
    %v779 = vadd.f32 %v747, %v751
    %v780 = vmax.f32 %v752, 0.0
    %v781 = vmax.f32 %v753, 0.0
    %v782 = vmax.f32 %v754, 0.0
    %v783 = vmax.f32 %v755, 0.0
    %v784 = vmax.f32 %v756, 0.0
    %v785 = vmax.f32 %v757, 0.0
    %v786 = vmax.f32 %v758, 0.0
    %v787 = vmax.f32 %v759, 0.0
    %v788 = vmax.f32 %v760, 0.0
    %v789 = vmax.f32 %v761, 0.0
    %v790 = vmax.f32 %v762, 0.0
    %v791 = vmax.f32 %v763, 0.0
    %v792 = vmax.f32 %v764, 0.0
    %v793 = vmax.f32 %v765, 0.0
    %v794 = vmax.f32 %v766, 0.0
    %v795 = vmax.f32 %v767, 0.0
    %v796 = vmax.f32 %v768, 0.0
    %v797 = vmax.f32 %v769, 0.0
    %v798 = vmax.f32 %v770, 0.0
    %v799 = vmax.f32 %v771, 0.0
    %v800 = vmax.f32 %v772, 0.0
    %v801 = vmax.f32 %v773, 0.0
    %v802 = vmax.f32 %v774, 0.0
    %v803 = vmax.f32 %v775, 0.0
    %v804 = vmax.f32 %v776, 0.0
    %v805 = vmax.f32 %v777, 0.0
    %v806 = vmax.f32 %v778, 0.0
    %v807 = vmax.f32 %v779, 0.0
    %v808 = vmax.f32 %v780, %v784
    %v809 = vmax.f32 %v782, %v786
    %v810 = vmax.f32 %v808, %v788
    %v811 = vmax.f32 %v809, %v790
    %v812 = vmax.f32 %v810, %v792
    %v813 = vmax.f32 %v811, %v794
    %v814 = vmax.f32 %v812, %v796
    %v815 = vmax.f32 %v813, %v798
    %v816 = vmax.f32 %v814, %v800
    %v817 = vmax.f32 %v815, %v802
    %v818 = vmax.f32 %v816, %v804
    %v819 = vmax.f32 %v817, %v806
    %v820 = vmax.f32 %v818, %v819
    %v821 = vmax.f32 %v781, %v785
    %v822 = vmax.f32 %v783, %v787
    %v823 = vmax.f32 %v821, %v789
    %v824 = vmax.f32 %v822, %v791
    %v825 = vmax.f32 %v823, %v793
    %v826 = vmax.f32 %v824, %v795
    %v827 = vmax.f32 %v825, %v797
    %v828 = vmax.f32 %v826, %v799
    %v829 = vmax.f32 %v827, %v801
    %v830 = vmax.f32 %v828, %v803
    %v831 = vmax.f32 %v829, %v805
    %v832 = vmax.f32 %v830, %v807
    %v833 = vmax.f32 %v831, %v832
    %v834 = vld [vmem:[#allocation5 + $0x30] sm:$0xf]
    %v835 = vld [vmem:[#allocation5 + $0x34] sm:$0xf]
    %v836 = vld [vmem:[#allocation5 + $0x38] sm:$0xf]
    %v837 = vld [vmem:[#allocation5 + $0x3c] sm:$0xf]
    %v838 = vld [vmem:[#allocation5 + $0x40] sm:$0xf]
    %v839 = vld [vmem:[#allocation5 + $0x44] sm:$0xf]
    %v840 = vld [vmem:[#allocation5 + $0x48] sm:$0xf]
    %v841 = vld [vmem:[#allocation5 + $0x4c] sm:$0xf]
    %v846 = vunpack.c.l.b16 %v838
    %v847 = vunpack.c.l.b16 %v839
    %v848 = vunpack.c.l.b16 %v840
    %v849 = vunpack.c.l.b16 %v841
    %v850 = vpack.c.b16 %v847, %v846
    %v851 = vpack.c.b16 %v849, %v848
    %854 = vmatprep.subr.bf16.mxu0 0
    %855 = vmatpush1.bf16.msra.mxu0 0
    %856 = vmatprep.subr.bf16.mxu0 0
    %857 = vmatpush1.bf16.msra.mxu0 0
    %858 = vmatprep.subr.bf16.mxu0 0
    %859 = vmatpush1.bf16.msra.mxu0 0
    %860 = vmatprep.subr.bf16.mxu0 0
    %861 = vmatpush1.bf16.msra.mxu0 0
    %862 = vmatprep.subr.bf16.mxu0 0
    %863 = vmatpush1.bf16.msra.mxu0 0
    %864 = vmatprep.subr.bf16.mxu0 0
    %865 = vmatpush1.bf16.msra.mxu0 0
    %866 = vmatprep.subr.bf16.mxu0 0
    %867 = vmatpush1.bf16.msra.mxu0 %v851
    %868 = vmatprep.subr.bf16.mxu0 0
    %869 = vmatpush1.bf16.msra.mxu0 %v850
    %870 = vmatprep.subr.bf16.mxu0 0
    %871 = vmatpush2.bf16.msra.mxu0 0
    %872 = vmatprep.subr.bf16.mxu0 0
    %873 = vmatpush2.bf16.msra.mxu0 0
    %874 = vmatprep.subr.bf16.mxu0 0
    %875 = vmatpush2.bf16.msra.mxu0 0
    %876 = vmatprep.subr.bf16.mxu0 0
    %877 = vmatpush2.bf16.msra.mxu0 0
    %878 = vmatprep.subr.bf16.mxu0 0
    %879 = vmatpush2.bf16.msra.mxu0 0
    %880 = vmatprep.subr.bf16.mxu0 0
    %881 = vmatpush2.bf16.msra.mxu0 0
    %882 = vmatprep.subr.bf16.mxu0 0
    %883 = vmatpush2.bf16.msra.mxu0 0
    %884 = vmatprep.subr.bf16.mxu0 0
    %885 = vmatpush2.bf16.msra.mxu0 0
    %886 = vmatprep.mubr.bf16.mxu0 0
    %887 = vmatmul.mubr.bf16.gmra.mxu0 %v200
    %v888 = vpop.f32.mrf.mxu0
    %v889 = vadd.f32 0.0, %v888
    %v890 = vpop.f32.mrf.mxu0
    %v891 = vpop.f32.mrf.mxu0
    %v892 = vadd.f32 0.0, %v891
    %v893 = vpop.f32.mrf.mxu0
    %894 = vmatprep.mubr.bf16.mxu0 0
    %895 = vmatmul.mubr.bf16.gmra.mxu0 %v203
    %v896 = vpop.f32.mrf.mxu0
    %v897 = vadd.f32 0.0, %v896
    %v898 = vpop.f32.mrf.mxu0
    %v899 = vpop.f32.mrf.mxu0
    %v900 = vadd.f32 0.0, %v899
    %v901 = vpop.f32.mrf.mxu0
    %902 = vmatprep.mubr.bf16.mxu0 0
    %903 = vmatmul.mubr.bf16.gmra.mxu0 %v206
    %v904 = vpop.f32.mrf.mxu0
    %v905 = vadd.f32 0.0, %v904
    %v906 = vpop.f32.mrf.mxu0
    %v907 = vpop.f32.mrf.mxu0
    %v908 = vadd.f32 0.0, %v907
    %v909 = vpop.f32.mrf.mxu0
    %910 = vmatprep.mubr.bf16.mxu0 0
    %911 = vmatmul.mubr.bf16.gmra.mxu0 %v209
    %v912 = vpop.f32.mrf.mxu0
    %v913 = vadd.f32 0.0, %v912
    %v914 = vpop.f32.mrf.mxu0
    %v915 = vpop.f32.mrf.mxu0
    %v916 = vadd.f32 0.0, %v915
    %v917 = vpop.f32.mrf.mxu0
    %918 = vmatprep.mubr.bf16.mxu0 0
    %919 = vmatmul.mubr.bf16.gmra.mxu0 %v212
    %v920 = vpop.f32.mrf.mxu0
    %v921 = vadd.f32 0.0, %v920
    %v922 = vpop.f32.mrf.mxu0
    %v923 = vpop.f32.mrf.mxu0
    %v924 = vadd.f32 0.0, %v923
    %v925 = vpop.f32.mrf.mxu0
    %926 = vmatprep.mubr.bf16.mxu0 0
    %927 = vmatmul.mubr.bf16.gmra.mxu0 %v215
    %v928 = vpop.f32.mrf.mxu0
    %v929 = vadd.f32 0.0, %v928
    %v930 = vpop.f32.mrf.mxu0
    %v931 = vpop.f32.mrf.mxu0
    %v932 = vadd.f32 0.0, %v931
    %v933 = vpop.f32.mrf.mxu0
    %934 = vmatprep.mubr.bf16.mxu0 0
    %935 = vmatmul.mubr.bf16.gmra.mxu0 %v218
    %v936 = vpop.f32.mrf.mxu0
    %v937 = vadd.f32 0.0, %v936
    %v938 = vpop.f32.mrf.mxu0
    %v939 = vpop.f32.mrf.mxu0
    %v940 = vadd.f32 0.0, %v939
    %v941 = vpop.f32.mrf.mxu0
    %942 = vmatprep.mubr.bf16.mxu0 0
    %943 = vmatmul.mubr.bf16.gmra.mxu0 %v221
    %v944 = vpop.f32.mrf.mxu0
    %v945 = vadd.f32 0.0, %v944
    %v946 = vpop.f32.mrf.mxu0
    %v947 = vpop.f32.mrf.mxu0
    %v948 = vadd.f32 0.0, %v947
    %v949 = vpop.f32.mrf.mxu0
    %950 = vmatprep.mubr.bf16.mxu0 0
    %951 = vmatmul.mubr.bf16.gmra.mxu0 %v224
    %v952 = vpop.f32.mrf.mxu0
    %v953 = vadd.f32 0.0, %v952
    %v954 = vpop.f32.mrf.mxu0
    %v955 = vpop.f32.mrf.mxu0
    %v956 = vadd.f32 0.0, %v955
    %v957 = vpop.f32.mrf.mxu0
    %958 = vmatprep.mubr.bf16.mxu0 0
    %959 = vmatmul.mubr.bf16.gmra.mxu0 %v227
    %v960 = vpop.f32.mrf.mxu0
    %v961 = vadd.f32 0.0, %v960
    %v962 = vpop.f32.mrf.mxu0
    %v963 = vpop.f32.mrf.mxu0
    %v964 = vadd.f32 0.0, %v963
    %v965 = vpop.f32.mrf.mxu0
    %966 = vmatprep.mubr.bf16.mxu0 0
    %967 = vmatmul.mubr.bf16.gmra.mxu0 %v230
    %v968 = vpop.f32.mrf.mxu0
    %v969 = vadd.f32 0.0, %v968
    %v970 = vpop.f32.mrf.mxu0
    %v971 = vpop.f32.mrf.mxu0
    %v972 = vadd.f32 0.0, %v971
    %v973 = vpop.f32.mrf.mxu0
    %974 = vmatprep.mubr.bf16.mxu0 0
    %975 = vmatmul.mubr.bf16.gmra.mxu0 %v233
    %v976 = vpop.f32.mrf.mxu0
    %v977 = vadd.f32 0.0, %v976
    %v978 = vpop.f32.mrf.mxu0
    %v979 = vpop.f32.mrf.mxu0
    %v980 = vadd.f32 0.0, %v979
    %v981 = vpop.f32.mrf.mxu0
    %982 = vmatprep.mubr.bf16.mxu0 0
    %983 = vmatmul.mubr.bf16.gmra.mxu0 %v236
    %v984 = vpop.f32.mrf.mxu0
    %v985 = vadd.f32 0.0, %v984
    %v986 = vpop.f32.mrf.mxu0
    %v987 = vpop.f32.mrf.mxu0
    %v988 = vadd.f32 0.0, %v987
    %v989 = vpop.f32.mrf.mxu0
    %990 = vdwg.mxu0
    %v995 = vunpack.c.l.b16 %v834
    %v996 = vunpack.c.l.b16 %v835
    %v997 = vunpack.c.l.b16 %v836
    %v998 = vunpack.c.l.b16 %v837
    %v999 = vpack.c.b16 %v996, %v995
    %v1000 = vpack.c.b16 %v998, %v997
    %1003 = vmatprep.subr.bf16.mxu0 0
    %1004 = vmatpush1.bf16.msra.mxu0 0
    %1005 = vmatprep.subr.bf16.mxu0 0
    %1006 = vmatpush1.bf16.msra.mxu0 0
    %1007 = vmatprep.subr.bf16.mxu0 0
    %1008 = vmatpush1.bf16.msra.mxu0 0
    %1009 = vmatprep.subr.bf16.mxu0 0
    %1010 = vmatpush1.bf16.msra.mxu0 0
    %1011 = vmatprep.subr.bf16.mxu0 0
    %1012 = vmatpush1.bf16.msra.mxu0 0
    %1013 = vmatprep.subr.bf16.mxu0 0
    %1014 = vmatpush1.bf16.msra.mxu0 0
    %1015 = vmatprep.subr.bf16.mxu0 0
    %1016 = vmatpush1.bf16.msra.mxu0 %v1000
    %1017 = vmatprep.subr.bf16.mxu0 0
    %1018 = vmatpush1.bf16.msra.mxu0 %v999
    %1019 = vmatprep.subr.bf16.mxu0 0
    %1020 = vmatpush2.bf16.msra.mxu0 0
    %1021 = vmatprep.subr.bf16.mxu0 0
    %1022 = vmatpush2.bf16.msra.mxu0 0
    %1023 = vmatprep.subr.bf16.mxu0 0
    %1024 = vmatpush2.bf16.msra.mxu0 0
    %1025 = vmatprep.subr.bf16.mxu0 0
    %1026 = vmatpush2.bf16.msra.mxu0 0
    %1027 = vmatprep.subr.bf16.mxu0 0
    %1028 = vmatpush2.bf16.msra.mxu0 0
    %1029 = vmatprep.subr.bf16.mxu0 0
    %1030 = vmatpush2.bf16.msra.mxu0 0
    %1031 = vmatprep.subr.bf16.mxu0 0
    %1032 = vmatpush2.bf16.msra.mxu0 0
    %1033 = vmatprep.subr.bf16.mxu0 0
    %1034 = vmatpush2.bf16.msra.mxu0 0
    %1035 = vmatprep.mubr.bf16.mxu0 0
    %1036 = vmatmul.mubr.bf16.gmra.mxu0 %v404
    %v1037 = vpop.f32.mrf.mxu0
    %v1038 = vadd.f32 %v889, %v1037
    %v1039 = vpop.f32.mrf.mxu0
    %v1040 = vpop.f32.mrf.mxu0
    %v1041 = vadd.f32 %v892, %v1040
    %v1042 = vpop.f32.mrf.mxu0
    %1043 = vmatprep.mubr.bf16.mxu0 0
    %1044 = vmatmul.mubr.bf16.gmra.mxu0 %v200
    %v1045 = vpop.f32.mrf.mxu0
    %v1046 = vadd.f32 %v897, %v1045
    %v1047 = vpop.f32.mrf.mxu0
    %v1048 = vpop.f32.mrf.mxu0
    %v1049 = vadd.f32 %v900, %v1048
    %v1050 = vpop.f32.mrf.mxu0
    %1051 = vmatprep.mubr.bf16.mxu0 0
    %1052 = vmatmul.mubr.bf16.gmra.mxu0 %v203
    %v1053 = vpop.f32.mrf.mxu0
    %v1054 = vadd.f32 %v905, %v1053
    %v1055 = vpop.f32.mrf.mxu0
    %v1056 = vpop.f32.mrf.mxu0
    %v1057 = vadd.f32 %v908, %v1056
    %v1058 = vpop.f32.mrf.mxu0
    %1059 = vmatprep.mubr.bf16.mxu0 0
    %1060 = vmatmul.mubr.bf16.gmra.mxu0 %v206
    %v1061 = vpop.f32.mrf.mxu0
    %v1062 = vadd.f32 %v913, %v1061
    %v1063 = vpop.f32.mrf.mxu0
    %v1064 = vpop.f32.mrf.mxu0
    %v1065 = vadd.f32 %v916, %v1064
    %v1066 = vpop.f32.mrf.mxu0
    %1067 = vmatprep.mubr.bf16.mxu0 0
    %1068 = vmatmul.mubr.bf16.gmra.mxu0 %v209
    %v1069 = vpop.f32.mrf.mxu0
    %v1070 = vadd.f32 %v921, %v1069
    %v1071 = vpop.f32.mrf.mxu0
    %v1072 = vpop.f32.mrf.mxu0
    %v1073 = vadd.f32 %v924, %v1072
    %v1074 = vpop.f32.mrf.mxu0
    %1075 = vmatprep.mubr.bf16.mxu0 0
    %1076 = vmatmul.mubr.bf16.gmra.mxu0 %v212
    %v1077 = vpop.f32.mrf.mxu0
    %v1078 = vadd.f32 %v929, %v1077
    %v1079 = vpop.f32.mrf.mxu0
    %v1080 = vpop.f32.mrf.mxu0
    %v1081 = vadd.f32 %v932, %v1080
    %v1082 = vpop.f32.mrf.mxu0
    %1083 = vmatprep.mubr.bf16.mxu0 0
    %1084 = vmatmul.mubr.bf16.gmra.mxu0 %v215
    %v1085 = vpop.f32.mrf.mxu0
    %v1086 = vadd.f32 %v937, %v1085
    %v1087 = vpop.f32.mrf.mxu0
    %v1088 = vpop.f32.mrf.mxu0
    %v1089 = vadd.f32 %v940, %v1088
    %v1090 = vpop.f32.mrf.mxu0
    %1091 = vmatprep.mubr.bf16.mxu0 0
    %1092 = vmatmul.mubr.bf16.gmra.mxu0 %v218
    %v1093 = vpop.f32.mrf.mxu0
    %v1094 = vadd.f32 %v945, %v1093
    %v1095 = vpop.f32.mrf.mxu0
    %v1096 = vpop.f32.mrf.mxu0
    %v1097 = vadd.f32 %v948, %v1096
    %v1098 = vpop.f32.mrf.mxu0
    %1099 = vmatprep.mubr.bf16.mxu0 0
    %1100 = vmatmul.mubr.bf16.gmra.mxu0 %v221
    %v1101 = vpop.f32.mrf.mxu0
    %v1102 = vadd.f32 %v953, %v1101
    %v1103 = vpop.f32.mrf.mxu0
    %v1104 = vpop.f32.mrf.mxu0
    %v1105 = vadd.f32 %v956, %v1104
    %v1106 = vpop.f32.mrf.mxu0
    %1107 = vmatprep.mubr.bf16.mxu0 0
    %1108 = vmatmul.mubr.bf16.gmra.mxu0 %v224
    %v1109 = vpop.f32.mrf.mxu0
    %v1110 = vadd.f32 %v961, %v1109
    %v1111 = vpop.f32.mrf.mxu0
    %v1112 = vpop.f32.mrf.mxu0
    %v1113 = vadd.f32 %v964, %v1112
    %v1114 = vpop.f32.mrf.mxu0
    %1115 = vmatprep.mubr.bf16.mxu0 0
    %1116 = vmatmul.mubr.bf16.gmra.mxu0 %v227
    %v1117 = vpop.f32.mrf.mxu0
    %v1118 = vadd.f32 %v969, %v1117
    %v1119 = vpop.f32.mrf.mxu0
    %v1120 = vpop.f32.mrf.mxu0
    %v1121 = vadd.f32 %v972, %v1120
    %v1122 = vpop.f32.mrf.mxu0
    %1123 = vmatprep.mubr.bf16.mxu0 0
    %1124 = vmatmul.mubr.bf16.gmra.mxu0 %v230
    %v1125 = vpop.f32.mrf.mxu0
    %v1126 = vadd.f32 %v977, %v1125
    %v1127 = vpop.f32.mrf.mxu0
    %v1128 = vpop.f32.mrf.mxu0
    %v1129 = vadd.f32 %v980, %v1128
    %v1130 = vpop.f32.mrf.mxu0
    %1131 = vmatprep.mubr.bf16.mxu0 0
    %1132 = vmatmul.mubr.bf16.gmra.mxu0 %v233
    %v1133 = vpop.f32.mrf.mxu0
    %v1134 = vadd.f32 %v985, %v1133
    %v1135 = vpop.f32.mrf.mxu0
    %v1136 = vpop.f32.mrf.mxu0
    %v1137 = vadd.f32 %v988, %v1136
    %v1138 = vpop.f32.mrf.mxu0
    %1139 = vdwg.mxu0
    %v1140 = vld [vmem:[#allocation5 + $0x50] sm:$0xf]
    %v1141 = vld [vmem:[#allocation5 + $0x54] sm:$0xf]
    %v1142 = vld [vmem:[#allocation5 + $0x58] sm:$0xf]
    %v1143 = vld [vmem:[#allocation5 + $0x5c] sm:$0xf]
    %v1148 = vunpack.c.l.b16 %v1140
    %v1149 = vunpack.c.l.b16 %v1141
    %v1150 = vunpack.c.l.b16 %v1142
    %v1151 = vunpack.c.l.b16 %v1143
    %v1152 = vpack.c.b16 %v1149, %v1148
    %v1153 = vpack.c.b16 %v1151, %v1150
    %1156 = vmatprep.subr.bf16.mxu0 0
    %1157 = vmatpush1.bf16.msra.mxu0 0
    %1158 = vmatprep.subr.bf16.mxu0 0
    %1159 = vmatpush1.bf16.msra.mxu0 0
    %1160 = vmatprep.subr.bf16.mxu0 0
    %1161 = vmatpush1.bf16.msra.mxu0 0
    %1162 = vmatprep.subr.bf16.mxu0 0
    %1163 = vmatpush1.bf16.msra.mxu0 0
    %1164 = vmatprep.subr.bf16.mxu0 0
    %1165 = vmatpush1.bf16.msra.mxu0 0
    %1166 = vmatprep.subr.bf16.mxu0 0
    %1167 = vmatpush1.bf16.msra.mxu0 0
    %1168 = vmatprep.subr.bf16.mxu0 0
    %1169 = vmatpush1.bf16.msra.mxu0 %v1153
    %1170 = vmatprep.subr.bf16.mxu0 0
    %1171 = vmatpush1.bf16.msra.mxu0 %v1152
    %1172 = vmatprep.subr.bf16.mxu0 0
    %1173 = vmatpush2.bf16.msra.mxu0 0
    %1174 = vmatprep.subr.bf16.mxu0 0
    %1175 = vmatpush2.bf16.msra.mxu0 0
    %1176 = vmatprep.subr.bf16.mxu0 0
    %1177 = vmatpush2.bf16.msra.mxu0 0
    %1178 = vmatprep.subr.bf16.mxu0 0
    %1179 = vmatpush2.bf16.msra.mxu0 0
    %1180 = vmatprep.subr.bf16.mxu0 0
    %1181 = vmatpush2.bf16.msra.mxu0 0
    %1182 = vmatprep.subr.bf16.mxu0 0
    %1183 = vmatpush2.bf16.msra.mxu0 0
    %1184 = vmatprep.subr.bf16.mxu0 0
    %1185 = vmatpush2.bf16.msra.mxu0 0
    %1186 = vmatprep.subr.bf16.mxu0 0
    %1187 = vmatpush2.bf16.msra.mxu0 0
    %1188 = vmatprep.mubr.bf16.mxu0 0
    %1189 = vmatmul.mubr.bf16.gmra.mxu0 %v203
    %v1190 = vpop.f32.mrf.mxu0
    %v1191 = vadd.f32 0.0, %v1190
    %v1192 = vpop.f32.mrf.mxu0
    %v1193 = vpop.f32.mrf.mxu0
    %v1194 = vadd.f32 0.0, %v1193
    %v1195 = vpop.f32.mrf.mxu0
    %1196 = vmatprep.mubr.bf16.mxu0 0
    %1197 = vmatmul.mubr.bf16.gmra.mxu0 %v206
    %v1198 = vpop.f32.mrf.mxu0
    %v1199 = vadd.f32 0.0, %v1198
    %v1200 = vpop.f32.mrf.mxu0
    %v1201 = vpop.f32.mrf.mxu0
    %v1202 = vadd.f32 0.0, %v1201
    %v1203 = vpop.f32.mrf.mxu0
    %1204 = vmatprep.mubr.bf16.mxu0 0
    %1205 = vmatmul.mubr.bf16.gmra.mxu0 %v209
    %v1206 = vpop.f32.mrf.mxu0
    %v1207 = vadd.f32 0.0, %v1206
    %v1208 = vpop.f32.mrf.mxu0
    %v1209 = vpop.f32.mrf.mxu0
    %v1210 = vadd.f32 0.0, %v1209
    %v1211 = vpop.f32.mrf.mxu0
    %1212 = vmatprep.mubr.bf16.mxu0 0
    %1213 = vmatmul.mubr.bf16.gmra.mxu0 %v212
    %v1214 = vpop.f32.mrf.mxu0
    %v1215 = vadd.f32 0.0, %v1214
    %v1216 = vpop.f32.mrf.mxu0
    %v1217 = vpop.f32.mrf.mxu0
    %v1218 = vadd.f32 0.0, %v1217
    %v1219 = vpop.f32.mrf.mxu0
    %1220 = vmatprep.mubr.bf16.mxu0 0
    %1221 = vmatmul.mubr.bf16.gmra.mxu0 %v215
    %v1222 = vpop.f32.mrf.mxu0
    %v1223 = vadd.f32 0.0, %v1222
    %v1224 = vpop.f32.mrf.mxu0
    %v1225 = vpop.f32.mrf.mxu0
    %v1226 = vadd.f32 0.0, %v1225
    %v1227 = vpop.f32.mrf.mxu0
    %1228 = vmatprep.mubr.bf16.mxu0 0
    %1229 = vmatmul.mubr.bf16.gmra.mxu0 %v218
    %v1230 = vpop.f32.mrf.mxu0
    %v1231 = vadd.f32 0.0, %v1230
    %v1232 = vpop.f32.mrf.mxu0
    %v1233 = vpop.f32.mrf.mxu0
    %v1234 = vadd.f32 0.0, %v1233
    %v1235 = vpop.f32.mrf.mxu0
    %1236 = vmatprep.mubr.bf16.mxu0 0
    %1237 = vmatmul.mubr.bf16.gmra.mxu0 %v221
    %v1238 = vpop.f32.mrf.mxu0
    %v1239 = vadd.f32 0.0, %v1238
    %v1240 = vpop.f32.mrf.mxu0
    %v1241 = vpop.f32.mrf.mxu0
    %v1242 = vadd.f32 0.0, %v1241
    %v1243 = vpop.f32.mrf.mxu0
    %1244 = vmatprep.mubr.bf16.mxu0 0
    %1245 = vmatmul.mubr.bf16.gmra.mxu0 %v224
    %v1246 = vpop.f32.mrf.mxu0
    %v1247 = vadd.f32 0.0, %v1246
    %v1248 = vpop.f32.mrf.mxu0
    %v1249 = vpop.f32.mrf.mxu0
    %v1250 = vadd.f32 0.0, %v1249
    %v1251 = vpop.f32.mrf.mxu0
    %1252 = vmatprep.mubr.bf16.mxu0 0
    %1253 = vmatmul.mubr.bf16.gmra.mxu0 %v227
    %v1254 = vpop.f32.mrf.mxu0
    %v1255 = vadd.f32 0.0, %v1254
    %v1256 = vpop.f32.mrf.mxu0
    %v1257 = vpop.f32.mrf.mxu0
    %v1258 = vadd.f32 0.0, %v1257
    %v1259 = vpop.f32.mrf.mxu0
    %1260 = vmatprep.mubr.bf16.mxu0 0
    %1261 = vmatmul.mubr.bf16.gmra.mxu0 %v230
    %v1262 = vpop.f32.mrf.mxu0
    %v1263 = vadd.f32 0.0, %v1262
    %v1264 = vpop.f32.mrf.mxu0
    %v1265 = vpop.f32.mrf.mxu0
    %v1266 = vadd.f32 0.0, %v1265
    %v1267 = vpop.f32.mrf.mxu0
    %1268 = vmatprep.mubr.bf16.mxu0 0
    %1269 = vmatmul.mubr.bf16.gmra.mxu0 %v233
    %v1270 = vpop.f32.mrf.mxu0
    %v1271 = vadd.f32 0.0, %v1270
    %v1272 = vpop.f32.mrf.mxu0
    %v1273 = vpop.f32.mrf.mxu0
    %v1274 = vadd.f32 0.0, %v1273
    %v1275 = vpop.f32.mrf.mxu0
    %1276 = vmatprep.mubr.bf16.mxu0 0
    %1277 = vmatmul.mubr.bf16.gmra.mxu0 %v236
    %v1278 = vpop.f32.mrf.mxu0
    %v1279 = vadd.f32 0.0, %v1278
    %v1280 = vpop.f32.mrf.mxu0
    %v1281 = vpop.f32.mrf.mxu0
    %v1282 = vadd.f32 0.0, %v1281
    %v1283 = vpop.f32.mrf.mxu0
    %1284 = vmatprep.mubr.bf16.mxu0 0
    %1285 = vmatmul.mubr.bf16.gmra.mxu0 %v239
    %v1286 = vpop.f32.mrf.mxu0
    %v1287 = vadd.f32 0.0, %v1286
    %v1288 = vpop.f32.mrf.mxu0
    %v1289 = vpop.f32.mrf.mxu0
    %v1290 = vadd.f32 0.0, %v1289
    %v1291 = vpop.f32.mrf.mxu0
    %1292 = vdwg.mxu0
    %v1293 = vadd.f32 %v1038, %v1191
    %v1294 = vadd.f32 %v1041, %v1194
    %v1295 = vadd.f32 %v1046, %v1199
    %v1296 = vadd.f32 %v1049, %v1202
    %v1297 = vadd.f32 %v1054, %v1207
    %v1298 = vadd.f32 %v1057, %v1210
    %v1299 = vadd.f32 %v1062, %v1215
    %v1300 = vadd.f32 %v1065, %v1218
    %v1301 = vadd.f32 %v1070, %v1223
    %v1302 = vadd.f32 %v1073, %v1226
    %v1303 = vadd.f32 %v1078, %v1231
    %v1304 = vadd.f32 %v1081, %v1234
    %v1305 = vadd.f32 %v1086, %v1239
    %v1306 = vadd.f32 %v1089, %v1242
    %v1307 = vadd.f32 %v1094, %v1247
    %v1308 = vadd.f32 %v1097, %v1250
    %v1309 = vadd.f32 %v1102, %v1255
    %v1310 = vadd.f32 %v1105, %v1258
    %v1311 = vadd.f32 %v1110, %v1263
    %v1312 = vadd.f32 %v1113, %v1266
    %v1313 = vadd.f32 %v1118, %v1271
    %v1314 = vadd.f32 %v1121, %v1274
    %v1315 = vadd.f32 %v1126, %v1279
    %v1316 = vadd.f32 %v1129, %v1282
    %v1317 = vadd.f32 %v1134, %v1287
    %v1318 = vadd.f32 %v1137, %v1290
    %v1319 = vld [vmem:[#allocation5 + $0x60] sm:$0xf]
    %v1320 = vld [vmem:[#allocation5 + $0x64] sm:$0xf]
    %v1321 = vld [vmem:[#allocation5 + $0x68] sm:$0xf]
    %v1322 = vld [vmem:[#allocation5 + $0x6c] sm:$0xf]
    %v1327 = vunpack.c.l.b16 %v1319
    %v1328 = vunpack.c.l.b16 %v1320
    %v1329 = vunpack.c.l.b16 %v1321
    %v1330 = vunpack.c.l.b16 %v1322
    %v1331 = vpack.c.b16 %v1328, %v1327
    %v1332 = vpack.c.b16 %v1330, %v1329
    %1335 = vmatprep.subr.bf16.mxu0 0
    %1336 = vmatpush1.bf16.msra.mxu0 0
    %1337 = vmatprep.subr.bf16.mxu0 0
    %1338 = vmatpush1.bf16.msra.mxu0 0
    %1339 = vmatprep.subr.bf16.mxu0 0
    %1340 = vmatpush1.bf16.msra.mxu0 0
    %1341 = vmatprep.subr.bf16.mxu0 0
    %1342 = vmatpush1.bf16.msra.mxu0 0
    %1343 = vmatprep.subr.bf16.mxu0 0
    %1344 = vmatpush1.bf16.msra.mxu0 0
    %1345 = vmatprep.subr.bf16.mxu0 0
    %1346 = vmatpush1.bf16.msra.mxu0 0
    %1347 = vmatprep.subr.bf16.mxu0 0
    %1348 = vmatpush1.bf16.msra.mxu0 %v1332
    %1349 = vmatprep.subr.bf16.mxu0 0
    %1350 = vmatpush1.bf16.msra.mxu0 %v1331
    %1351 = vmatprep.subr.bf16.mxu0 0
    %1352 = vmatpush2.bf16.msra.mxu0 0
    %1353 = vmatprep.subr.bf16.mxu0 0
    %1354 = vmatpush2.bf16.msra.mxu0 0
    %1355 = vmatprep.subr.bf16.mxu0 0
    %1356 = vmatpush2.bf16.msra.mxu0 0
    %1357 = vmatprep.subr.bf16.mxu0 0
    %1358 = vmatpush2.bf16.msra.mxu0 0
    %1359 = vmatprep.subr.bf16.mxu0 0
    %1360 = vmatpush2.bf16.msra.mxu0 0
    %1361 = vmatprep.subr.bf16.mxu0 0
    %1362 = vmatpush2.bf16.msra.mxu0 0
    %1363 = vmatprep.subr.bf16.mxu0 0
    %1364 = vmatpush2.bf16.msra.mxu0 0
    %1365 = vmatprep.subr.bf16.mxu0 0
    %1366 = vmatpush2.bf16.msra.mxu0 0
    %1367 = vmatprep.mubr.bf16.mxu0 0
    %1368 = vmatmul.mubr.bf16.gmra.mxu0 %v206
    %v1369 = vpop.f32.mrf.mxu0
    %v1370 = vadd.f32 0.0, %v1369
    %v1371 = vpop.f32.mrf.mxu0
    %v1372 = vpop.f32.mrf.mxu0
    %v1373 = vadd.f32 0.0, %v1372
    %v1374 = vpop.f32.mrf.mxu0
    %1375 = vmatprep.mubr.bf16.mxu0 0
    %1376 = vmatmul.mubr.bf16.gmra.mxu0 %v209
    %v1377 = vpop.f32.mrf.mxu0
    %v1378 = vadd.f32 0.0, %v1377
    %v1379 = vpop.f32.mrf.mxu0
    %v1380 = vpop.f32.mrf.mxu0
    %v1381 = vadd.f32 0.0, %v1380
    %v1382 = vpop.f32.mrf.mxu0
    %1383 = vmatprep.mubr.bf16.mxu0 0
    %1384 = vmatmul.mubr.bf16.gmra.mxu0 %v212
    %v1385 = vpop.f32.mrf.mxu0
    %v1386 = vadd.f32 0.0, %v1385
    %v1387 = vpop.f32.mrf.mxu0
    %v1388 = vpop.f32.mrf.mxu0
    %v1389 = vadd.f32 0.0, %v1388
    %v1390 = vpop.f32.mrf.mxu0
    %1391 = vmatprep.mubr.bf16.mxu0 0
    %1392 = vmatmul.mubr.bf16.gmra.mxu0 %v215
    %v1393 = vpop.f32.mrf.mxu0
    %v1394 = vadd.f32 0.0, %v1393
    %v1395 = vpop.f32.mrf.mxu0
    %v1396 = vpop.f32.mrf.mxu0
    %v1397 = vadd.f32 0.0, %v1396
    %v1398 = vpop.f32.mrf.mxu0
    %1399 = vmatprep.mubr.bf16.mxu0 0
    %1400 = vmatmul.mubr.bf16.gmra.mxu0 %v218
    %v1401 = vpop.f32.mrf.mxu0
    %v1402 = vadd.f32 0.0, %v1401
    %v1403 = vpop.f32.mrf.mxu0
    %v1404 = vpop.f32.mrf.mxu0
    %v1405 = vadd.f32 0.0, %v1404
    %v1406 = vpop.f32.mrf.mxu0
    %1407 = vmatprep.mubr.bf16.mxu0 0
    %1408 = vmatmul.mubr.bf16.gmra.mxu0 %v221
    %v1409 = vpop.f32.mrf.mxu0
    %v1410 = vadd.f32 0.0, %v1409
    %v1411 = vpop.f32.mrf.mxu0
    %v1412 = vpop.f32.mrf.mxu0
    %v1413 = vadd.f32 0.0, %v1412
    %v1414 = vpop.f32.mrf.mxu0
    %1415 = vmatprep.mubr.bf16.mxu0 0
    %1416 = vmatmul.mubr.bf16.gmra.mxu0 %v224
    %v1417 = vpop.f32.mrf.mxu0
    %v1418 = vadd.f32 0.0, %v1417
    %v1419 = vpop.f32.mrf.mxu0
    %v1420 = vpop.f32.mrf.mxu0
    %v1421 = vadd.f32 0.0, %v1420
    %v1422 = vpop.f32.mrf.mxu0
    %1423 = vmatprep.mubr.bf16.mxu0 0
    %1424 = vmatmul.mubr.bf16.gmra.mxu0 %v227
    %v1425 = vpop.f32.mrf.mxu0
    %v1426 = vadd.f32 0.0, %v1425
    %v1427 = vpop.f32.mrf.mxu0
    %v1428 = vpop.f32.mrf.mxu0
    %v1429 = vadd.f32 0.0, %v1428
    %v1430 = vpop.f32.mrf.mxu0
    %1431 = vmatprep.mubr.bf16.mxu0 0
    %1432 = vmatmul.mubr.bf16.gmra.mxu0 %v230
    %v1433 = vpop.f32.mrf.mxu0
    %v1434 = vadd.f32 0.0, %v1433
    %v1435 = vpop.f32.mrf.mxu0
    %v1436 = vpop.f32.mrf.mxu0
    %v1437 = vadd.f32 0.0, %v1436
    %v1438 = vpop.f32.mrf.mxu0
    %1439 = vmatprep.mubr.bf16.mxu0 0
    %1440 = vmatmul.mubr.bf16.gmra.mxu0 %v233
    %v1441 = vpop.f32.mrf.mxu0
    %v1442 = vadd.f32 0.0, %v1441
    %v1443 = vpop.f32.mrf.mxu0
    %v1444 = vpop.f32.mrf.mxu0
    %v1445 = vadd.f32 0.0, %v1444
    %v1446 = vpop.f32.mrf.mxu0
    %1447 = vmatprep.mubr.bf16.mxu0 0
    %1448 = vmatmul.mubr.bf16.gmra.mxu0 %v236
    %v1449 = vpop.f32.mrf.mxu0
    %v1450 = vadd.f32 0.0, %v1449
    %v1451 = vpop.f32.mrf.mxu0
    %v1452 = vpop.f32.mrf.mxu0
    %v1453 = vadd.f32 0.0, %v1452
    %v1454 = vpop.f32.mrf.mxu0
    %1455 = vmatprep.mubr.bf16.mxu0 0
    %1456 = vmatmul.mubr.bf16.gmra.mxu0 %v239
    %v1457 = vpop.f32.mrf.mxu0
    %v1458 = vadd.f32 0.0, %v1457
    %v1459 = vpop.f32.mrf.mxu0
    %v1460 = vpop.f32.mrf.mxu0
    %v1461 = vadd.f32 0.0, %v1460
    %v1462 = vpop.f32.mrf.mxu0
    %1463 = vmatprep.mubr.bf16.mxu0 0
    %1464 = vmatmul.mubr.bf16.gmra.mxu0 %v573
    %v1465 = vpop.f32.mrf.mxu0
    %v1466 = vadd.f32 0.0, %v1465
    %v1467 = vpop.f32.mrf.mxu0
    %v1468 = vpop.f32.mrf.mxu0
    %v1469 = vadd.f32 0.0, %v1468
    %v1470 = vpop.f32.mrf.mxu0
    %1471 = vdwg.mxu0
    %v1472 = vadd.f32 %v1293, %v1370
    %v1473 = vadd.f32 %v1294, %v1373
    %v1474 = vadd.f32 %v1295, %v1378
    %v1475 = vadd.f32 %v1296, %v1381
    %v1476 = vadd.f32 %v1297, %v1386
    %v1477 = vadd.f32 %v1298, %v1389
    %v1478 = vadd.f32 %v1299, %v1394
    %v1479 = vadd.f32 %v1300, %v1397
    %v1480 = vadd.f32 %v1301, %v1402
    %v1481 = vadd.f32 %v1302, %v1405
    %v1482 = vadd.f32 %v1303, %v1410
    %v1483 = vadd.f32 %v1304, %v1413
    %v1484 = vadd.f32 %v1305, %v1418
    %v1485 = vadd.f32 %v1306, %v1421
    %v1486 = vadd.f32 %v1307, %v1426
    %v1487 = vadd.f32 %v1308, %v1429
    %v1488 = vadd.f32 %v1309, %v1434
    %v1489 = vadd.f32 %v1310, %v1437
    %v1490 = vadd.f32 %v1311, %v1442
    %v1491 = vadd.f32 %v1312, %v1445
    %v1492 = vadd.f32 %v1313, %v1450
    %v1493 = vadd.f32 %v1314, %v1453
    %v1494 = vadd.f32 %v1315, %v1458
    %v1495 = vadd.f32 %v1316, %v1461
    %v1496 = vadd.f32 %v1317, %v1466
    %v1497 = vadd.f32 %v1318, %v1469
    %v1498 = vlaneseq
    %v1499 = vshrl.u32 %v1498, 7
    %v1500 = vsub.s32 1, %v1499
    %v1501 = vrot.slane %v107, %v1500
    %v1502 = vadd.f32 %v1472, %v1501
    %v1503 = vadd.f32 %v1473, %v1501
    %v1504 = vadd.f32 %v1474, %v1501
    %v1505 = vadd.f32 %v1475, %v1501
    %v1506 = vadd.f32 %v1476, %v1501
    %v1507 = vadd.f32 %v1477, %v1501
    %v1508 = vadd.f32 %v1478, %v1501
    %v1509 = vadd.f32 %v1479, %v1501
    %v1510 = vadd.f32 %v1480, %v1501
    %v1511 = vadd.f32 %v1481, %v1501
    %v1512 = vadd.f32 %v1482, %v1501
    %v1513 = vadd.f32 %v1483, %v1501
    %v1514 = vadd.f32 %v1484, %v1501
    %v1515 = vadd.f32 %v1485, %v1501
    %v1516 = vadd.f32 %v1486, %v1501
    %v1517 = vadd.f32 %v1487, %v1501
    %v1518 = vadd.f32 %v1488, %v1501
    %v1519 = vadd.f32 %v1489, %v1501
    %v1520 = vadd.f32 %v1490, %v1501
    %v1521 = vadd.f32 %v1491, %v1501
    %v1522 = vadd.f32 %v1492, %v1501
    %v1523 = vadd.f32 %v1493, %v1501
    %v1524 = vadd.f32 %v1494, %v1501
    %v1525 = vadd.f32 %v1495, %v1501
    %v1526 = vadd.f32 %v1496, %v1501
    %v1527 = vadd.f32 %v1497, %v1501
    %v1528 = vmax.f32 %v1502, 0.0
    %v1529 = vmax.f32 %v1503, 0.0
    %v1530 = vmax.f32 %v1504, 0.0
    %v1531 = vmax.f32 %v1505, 0.0
    %v1532 = vmax.f32 %v1506, 0.0
    %v1533 = vmax.f32 %v1507, 0.0
    %v1534 = vmax.f32 %v1508, 0.0
    %v1535 = vmax.f32 %v1509, 0.0
    %v1536 = vmax.f32 %v1510, 0.0
    %v1537 = vmax.f32 %v1511, 0.0
    %v1538 = vmax.f32 %v1512, 0.0
    %v1539 = vmax.f32 %v1513, 0.0
    %v1540 = vmax.f32 %v1514, 0.0
    %v1541 = vmax.f32 %v1515, 0.0
    %v1542 = vmax.f32 %v1516, 0.0
    %v1543 = vmax.f32 %v1517, 0.0
    %v1544 = vmax.f32 %v1518, 0.0
    %v1545 = vmax.f32 %v1519, 0.0
    %v1546 = vmax.f32 %v1520, 0.0
    %v1547 = vmax.f32 %v1521, 0.0
    %v1548 = vmax.f32 %v1522, 0.0
    %v1549 = vmax.f32 %v1523, 0.0
    %v1550 = vmax.f32 %v1524, 0.0
    %v1551 = vmax.f32 %v1525, 0.0
    %v1552 = vmax.f32 %v1526, 0.0
    %v1553 = vmax.f32 %v1527, 0.0
    %v1554 = vmax.f32 %v1528, %v1532
    %v1555 = vmax.f32 %v1530, %v1534
    %v1556 = vmax.f32 %v1554, %v1536
    %v1557 = vmax.f32 %v1555, %v1538
    %v1558 = vmax.f32 %v1556, %v1540
    %v1559 = vmax.f32 %v1557, %v1542
    %v1560 = vmax.f32 %v1558, %v1544
    %v1561 = vmax.f32 %v1559, %v1546
    %v1562 = vmax.f32 %v1560, %v1548
    %v1563 = vmax.f32 %v1561, %v1550
    %v1564 = vmax.f32 %v1562, %v1552
    %v1565 = vmax.f32 %v1564, %v1563
    %v1566 = vmax.f32 %v1529, %v1533
    %v1567 = vmax.f32 %v1531, %v1535
    %v1568 = vmax.f32 %v1566, %v1537
    %v1569 = vmax.f32 %v1567, %v1539
    %v1570 = vmax.f32 %v1568, %v1541
    %v1571 = vmax.f32 %v1569, %v1543
    %v1572 = vmax.f32 %v1570, %v1545
    %v1573 = vmax.f32 %v1571, %v1547
    %v1574 = vmax.f32 %v1572, %v1549
    %v1575 = vmax.f32 %v1573, %v1551
    %v1576 = vmax.f32 %v1574, %v1553
    %v1577 = vmax.f32 %v1576, %v1575
    %v1578 = vld [vmem:[#allocation5 + $0x70] sm:$0xf]
    %v1579 = vld [vmem:[#allocation5 + $0x74] sm:$0xf]
    %v1580 = vld [vmem:[#allocation5 + $0x78] sm:$0xf]
    %v1581 = vld [vmem:[#allocation5 + $0x7c] sm:$0xf]
    %v1582 = vld [vmem:[#allocation5 + $0x80] sm:$0xf]
    %v1583 = vld [vmem:[#allocation5 + $0x84] sm:$0xf]
    %v1584 = vld [vmem:[#allocation5 + $0x88] sm:$0xf]
    %v1585 = vld [vmem:[#allocation5 + $0x8c] sm:$0xf]
    %v1590 = vunpack.c.l.b16 %v1582
    %v1591 = vunpack.c.l.b16 %v1583
    %v1592 = vunpack.c.l.b16 %v1584
    %v1593 = vunpack.c.l.b16 %v1585
    %v1594 = vpack.c.b16 %v1591, %v1590
    %v1595 = vpack.c.b16 %v1593, %v1592
    %1598 = vmatprep.subr.bf16.mxu0 0
    %1599 = vmatpush1.bf16.msra.mxu0 0
    %1600 = vmatprep.subr.bf16.mxu0 0
    %1601 = vmatpush1.bf16.msra.mxu0 0
    %1602 = vmatprep.subr.bf16.mxu0 0
    %1603 = vmatpush1.bf16.msra.mxu0 0
    %1604 = vmatprep.subr.bf16.mxu0 0
    %1605 = vmatpush1.bf16.msra.mxu0 0
    %1606 = vmatprep.subr.bf16.mxu0 0
    %1607 = vmatpush1.bf16.msra.mxu0 0
    %1608 = vmatprep.subr.bf16.mxu0 0
    %1609 = vmatpush1.bf16.msra.mxu0 0
    %1610 = vmatprep.subr.bf16.mxu0 0
    %1611 = vmatpush1.bf16.msra.mxu0 %v1595
    %1612 = vmatprep.subr.bf16.mxu0 0
    %1613 = vmatpush1.bf16.msra.mxu0 %v1594
    %1614 = vmatprep.subr.bf16.mxu0 0
    %1615 = vmatpush2.bf16.msra.mxu0 0
    %1616 = vmatprep.subr.bf16.mxu0 0
    %1617 = vmatpush2.bf16.msra.mxu0 0
    %1618 = vmatprep.subr.bf16.mxu0 0
    %1619 = vmatpush2.bf16.msra.mxu0 0
    %1620 = vmatprep.subr.bf16.mxu0 0
    %1621 = vmatpush2.bf16.msra.mxu0 0
    %1622 = vmatprep.subr.bf16.mxu0 0
    %1623 = vmatpush2.bf16.msra.mxu0 0
    %1624 = vmatprep.subr.bf16.mxu0 0
    %1625 = vmatpush2.bf16.msra.mxu0 0
    %1626 = vmatprep.subr.bf16.mxu0 0
    %1627 = vmatpush2.bf16.msra.mxu0 0
    %1628 = vmatprep.subr.bf16.mxu0 0
    %1629 = vmatpush2.bf16.msra.mxu0 0
    %1630 = vmatprep.mubr.bf16.mxu0 0
    %1631 = vmatmul.mubr.bf16.gmra.mxu0 %v200
    %v1632 = vpop.f32.mrf.mxu0
    %v1633 = vadd.f32 0.0, %v1632
    %v1634 = vpop.f32.mrf.mxu0
    %v1635 = vpop.f32.mrf.mxu0
    %v1636 = vadd.f32 0.0, %v1635
    %v1637 = vpop.f32.mrf.mxu0
    %1638 = vmatprep.mubr.bf16.mxu0 0
    %1639 = vmatmul.mubr.bf16.gmra.mxu0 %v203
    %v1640 = vpop.f32.mrf.mxu0
    %v1641 = vadd.f32 0.0, %v1640
    %v1642 = vpop.f32.mrf.mxu0
    %v1643 = vpop.f32.mrf.mxu0
    %v1644 = vadd.f32 0.0, %v1643
    %v1645 = vpop.f32.mrf.mxu0
    %1646 = vmatprep.mubr.bf16.mxu0 0
    %1647 = vmatmul.mubr.bf16.gmra.mxu0 %v206
    %v1648 = vpop.f32.mrf.mxu0
    %v1649 = vadd.f32 0.0, %v1648
    %v1650 = vpop.f32.mrf.mxu0
    %v1651 = vpop.f32.mrf.mxu0
    %v1652 = vadd.f32 0.0, %v1651
    %v1653 = vpop.f32.mrf.mxu0
    %1654 = vmatprep.mubr.bf16.mxu0 0
    %1655 = vmatmul.mubr.bf16.gmra.mxu0 %v209
    %v1656 = vpop.f32.mrf.mxu0
    %v1657 = vadd.f32 0.0, %v1656
    %v1658 = vpop.f32.mrf.mxu0
    %v1659 = vpop.f32.mrf.mxu0
    %v1660 = vadd.f32 0.0, %v1659
    %v1661 = vpop.f32.mrf.mxu0
    %1662 = vmatprep.mubr.bf16.mxu0 0
    %1663 = vmatmul.mubr.bf16.gmra.mxu0 %v212
    %v1664 = vpop.f32.mrf.mxu0
    %v1665 = vadd.f32 0.0, %v1664
    %v1666 = vpop.f32.mrf.mxu0
    %v1667 = vpop.f32.mrf.mxu0
    %v1668 = vadd.f32 0.0, %v1667
    %v1669 = vpop.f32.mrf.mxu0
    %1670 = vmatprep.mubr.bf16.mxu0 0
    %1671 = vmatmul.mubr.bf16.gmra.mxu0 %v215
    %v1672 = vpop.f32.mrf.mxu0
    %v1673 = vadd.f32 0.0, %v1672
    %v1674 = vpop.f32.mrf.mxu0
    %v1675 = vpop.f32.mrf.mxu0
    %v1676 = vadd.f32 0.0, %v1675
    %v1677 = vpop.f32.mrf.mxu0
    %1678 = vmatprep.mubr.bf16.mxu0 0
    %1679 = vmatmul.mubr.bf16.gmra.mxu0 %v218
    %v1680 = vpop.f32.mrf.mxu0
    %v1681 = vadd.f32 0.0, %v1680
    %v1682 = vpop.f32.mrf.mxu0
    %v1683 = vpop.f32.mrf.mxu0
    %v1684 = vadd.f32 0.0, %v1683
    %v1685 = vpop.f32.mrf.mxu0
    %1686 = vmatprep.mubr.bf16.mxu0 0
    %1687 = vmatmul.mubr.bf16.gmra.mxu0 %v221
    %v1688 = vpop.f32.mrf.mxu0
    %v1689 = vadd.f32 0.0, %v1688
    %v1690 = vpop.f32.mrf.mxu0
    %v1691 = vpop.f32.mrf.mxu0
    %v1692 = vadd.f32 0.0, %v1691
    %v1693 = vpop.f32.mrf.mxu0
    %1694 = vmatprep.mubr.bf16.mxu0 0
    %1695 = vmatmul.mubr.bf16.gmra.mxu0 %v224
    %v1696 = vpop.f32.mrf.mxu0
    %v1697 = vadd.f32 0.0, %v1696
    %v1698 = vpop.f32.mrf.mxu0
    %v1699 = vpop.f32.mrf.mxu0
    %v1700 = vadd.f32 0.0, %v1699
    %v1701 = vpop.f32.mrf.mxu0
    %1702 = vmatprep.mubr.bf16.mxu0 0
    %1703 = vmatmul.mubr.bf16.gmra.mxu0 %v227
    %v1704 = vpop.f32.mrf.mxu0
    %v1705 = vadd.f32 0.0, %v1704
    %v1706 = vpop.f32.mrf.mxu0
    %v1707 = vpop.f32.mrf.mxu0
    %v1708 = vadd.f32 0.0, %v1707
    %v1709 = vpop.f32.mrf.mxu0
    %1710 = vmatprep.mubr.bf16.mxu0 0
    %1711 = vmatmul.mubr.bf16.gmra.mxu0 %v230
    %v1712 = vpop.f32.mrf.mxu0
    %v1713 = vadd.f32 0.0, %v1712
    %v1714 = vpop.f32.mrf.mxu0
    %v1715 = vpop.f32.mrf.mxu0
    %v1716 = vadd.f32 0.0, %v1715
    %v1717 = vpop.f32.mrf.mxu0
    %1718 = vmatprep.mubr.bf16.mxu0 0
    %1719 = vmatmul.mubr.bf16.gmra.mxu0 %v233
    %v1720 = vpop.f32.mrf.mxu0
    %v1721 = vadd.f32 0.0, %v1720
    %v1722 = vpop.f32.mrf.mxu0
    %v1723 = vpop.f32.mrf.mxu0
    %v1724 = vadd.f32 0.0, %v1723
    %v1725 = vpop.f32.mrf.mxu0
    %1726 = vdwg.mxu0
    %v1731 = vunpack.c.l.b16 %v1578
    %v1732 = vunpack.c.l.b16 %v1579
    %v1733 = vunpack.c.l.b16 %v1580
    %v1734 = vunpack.c.l.b16 %v1581
    %v1735 = vpack.c.b16 %v1732, %v1731
    %v1736 = vpack.c.b16 %v1734, %v1733
    %1739 = vmatprep.subr.bf16.mxu0 0
    %1740 = vmatpush1.bf16.msra.mxu0 0
    %1741 = vmatprep.subr.bf16.mxu0 0
    %1742 = vmatpush1.bf16.msra.mxu0 0
    %1743 = vmatprep.subr.bf16.mxu0 0
    %1744 = vmatpush1.bf16.msra.mxu0 0
    %1745 = vmatprep.subr.bf16.mxu0 0
    %1746 = vmatpush1.bf16.msra.mxu0 0
    %1747 = vmatprep.subr.bf16.mxu0 0
    %1748 = vmatpush1.bf16.msra.mxu0 0
    %1749 = vmatprep.subr.bf16.mxu0 0
    %1750 = vmatpush1.bf16.msra.mxu0 0
    %1751 = vmatprep.subr.bf16.mxu0 0
    %1752 = vmatpush1.bf16.msra.mxu0 %v1736
    %1753 = vmatprep.subr.bf16.mxu0 0
    %1754 = vmatpush1.bf16.msra.mxu0 %v1735
    %1755 = vmatprep.subr.bf16.mxu0 0
    %1756 = vmatpush2.bf16.msra.mxu0 0
    %1757 = vmatprep.subr.bf16.mxu0 0
    %1758 = vmatpush2.bf16.msra.mxu0 0
    %1759 = vmatprep.subr.bf16.mxu0 0
    %1760 = vmatpush2.bf16.msra.mxu0 0
    %1761 = vmatprep.subr.bf16.mxu0 0
    %1762 = vmatpush2.bf16.msra.mxu0 0
    %1763 = vmatprep.subr.bf16.mxu0 0
    %1764 = vmatpush2.bf16.msra.mxu0 0
    %1765 = vmatprep.subr.bf16.mxu0 0
    %1766 = vmatpush2.bf16.msra.mxu0 0
    %1767 = vmatprep.subr.bf16.mxu0 0
    %1768 = vmatpush2.bf16.msra.mxu0 0
    %1769 = vmatprep.subr.bf16.mxu0 0
    %1770 = vmatpush2.bf16.msra.mxu0 0
    %1771 = vmatprep.mubr.bf16.mxu0 0
    %1772 = vmatmul.mubr.bf16.gmra.mxu0 %v404
    %v1773 = vpop.f32.mrf.mxu0
    %v1774 = vadd.f32 %v1633, %v1773
    %v1775 = vpop.f32.mrf.mxu0
    %v1776 = vpop.f32.mrf.mxu0
    %v1777 = vadd.f32 %v1636, %v1776
    %v1778 = vpop.f32.mrf.mxu0
    %1779 = vmatprep.mubr.bf16.mxu0 0
    %1780 = vmatmul.mubr.bf16.gmra.mxu0 %v200
    %v1781 = vpop.f32.mrf.mxu0
    %v1782 = vadd.f32 %v1641, %v1781
    %v1783 = vpop.f32.mrf.mxu0
    %v1784 = vpop.f32.mrf.mxu0
    %v1785 = vadd.f32 %v1644, %v1784
    %v1786 = vpop.f32.mrf.mxu0
    %1787 = vmatprep.mubr.bf16.mxu0 0
    %1788 = vmatmul.mubr.bf16.gmra.mxu0 %v203
    %v1789 = vpop.f32.mrf.mxu0
    %v1790 = vadd.f32 %v1649, %v1789
    %v1791 = vpop.f32.mrf.mxu0
    %v1792 = vpop.f32.mrf.mxu0
    %v1793 = vadd.f32 %v1652, %v1792
    %v1794 = vpop.f32.mrf.mxu0
    %1795 = vmatprep.mubr.bf16.mxu0 0
    %1796 = vmatmul.mubr.bf16.gmra.mxu0 %v206
    %v1797 = vpop.f32.mrf.mxu0
    %v1798 = vadd.f32 %v1657, %v1797
    %v1799 = vpop.f32.mrf.mxu0
    %v1800 = vpop.f32.mrf.mxu0
    %v1801 = vadd.f32 %v1660, %v1800
    %v1802 = vpop.f32.mrf.mxu0
    %1803 = vmatprep.mubr.bf16.mxu0 0
    %1804 = vmatmul.mubr.bf16.gmra.mxu0 %v209
    %v1805 = vpop.f32.mrf.mxu0
    %v1806 = vadd.f32 %v1665, %v1805
    %v1807 = vpop.f32.mrf.mxu0
    %v1808 = vpop.f32.mrf.mxu0
    %v1809 = vadd.f32 %v1668, %v1808
    %v1810 = vpop.f32.mrf.mxu0
    %1811 = vmatprep.mubr.bf16.mxu0 0
    %1812 = vmatmul.mubr.bf16.gmra.mxu0 %v212
    %v1813 = vpop.f32.mrf.mxu0
    %v1814 = vadd.f32 %v1673, %v1813
    %v1815 = vpop.f32.mrf.mxu0
    %v1816 = vpop.f32.mrf.mxu0
    %v1817 = vadd.f32 %v1676, %v1816
    %v1818 = vpop.f32.mrf.mxu0
    %1819 = vmatprep.mubr.bf16.mxu0 0
    %1820 = vmatmul.mubr.bf16.gmra.mxu0 %v215
    %v1821 = vpop.f32.mrf.mxu0
    %v1822 = vadd.f32 %v1681, %v1821
    %v1823 = vpop.f32.mrf.mxu0
    %v1824 = vpop.f32.mrf.mxu0
    %v1825 = vadd.f32 %v1684, %v1824
    %v1826 = vpop.f32.mrf.mxu0
    %1827 = vmatprep.mubr.bf16.mxu0 0
    %1828 = vmatmul.mubr.bf16.gmra.mxu0 %v218
    %v1829 = vpop.f32.mrf.mxu0
    %v1830 = vadd.f32 %v1689, %v1829
    %v1831 = vpop.f32.mrf.mxu0
    %v1832 = vpop.f32.mrf.mxu0
    %v1833 = vadd.f32 %v1692, %v1832
    %v1834 = vpop.f32.mrf.mxu0
    %1835 = vmatprep.mubr.bf16.mxu0 0
    %1836 = vmatmul.mubr.bf16.gmra.mxu0 %v221
    %v1837 = vpop.f32.mrf.mxu0
    %v1838 = vadd.f32 %v1697, %v1837
    %v1839 = vpop.f32.mrf.mxu0
    %v1840 = vpop.f32.mrf.mxu0
    %v1841 = vadd.f32 %v1700, %v1840
    %v1842 = vpop.f32.mrf.mxu0
    %1843 = vmatprep.mubr.bf16.mxu0 0
    %1844 = vmatmul.mubr.bf16.gmra.mxu0 %v224
    %v1845 = vpop.f32.mrf.mxu0
    %v1846 = vadd.f32 %v1705, %v1845
    %v1847 = vpop.f32.mrf.mxu0
    %v1848 = vpop.f32.mrf.mxu0
    %v1849 = vadd.f32 %v1708, %v1848
    %v1850 = vpop.f32.mrf.mxu0
    %1851 = vmatprep.mubr.bf16.mxu0 0
    %1852 = vmatmul.mubr.bf16.gmra.mxu0 %v227
    %v1853 = vpop.f32.mrf.mxu0
    %v1854 = vadd.f32 %v1713, %v1853
    %v1855 = vpop.f32.mrf.mxu0
    %v1856 = vpop.f32.mrf.mxu0
    %v1857 = vadd.f32 %v1716, %v1856
    %v1858 = vpop.f32.mrf.mxu0
    %1859 = vmatprep.mubr.bf16.mxu0 0
    %1860 = vmatmul.mubr.bf16.gmra.mxu0 %v230
    %v1861 = vpop.f32.mrf.mxu0
    %v1862 = vadd.f32 %v1721, %v1861
    %v1863 = vpop.f32.mrf.mxu0
    %v1864 = vpop.f32.mrf.mxu0
    %v1865 = vadd.f32 %v1724, %v1864
    %v1866 = vpop.f32.mrf.mxu0
    %1867 = vdwg.mxu0
    %v1868 = vld [vmem:[#allocation5 + $0x90] sm:$0xf]
    %v1869 = vld [vmem:[#allocation5 + $0x94] sm:$0xf]
    %v1870 = vld [vmem:[#allocation5 + $0x98] sm:$0xf]
    %v1871 = vld [vmem:[#allocation5 + $0x9c] sm:$0xf]
    %v1876 = vunpack.c.l.b16 %v1868
    %v1877 = vunpack.c.l.b16 %v1869
    %v1878 = vunpack.c.l.b16 %v1870
    %v1879 = vunpack.c.l.b16 %v1871
    %v1880 = vpack.c.b16 %v1877, %v1876
    %v1881 = vpack.c.b16 %v1879, %v1878
    %1884 = vmatprep.subr.bf16.mxu0 0
    %1885 = vmatpush1.bf16.msra.mxu0 0
    %1886 = vmatprep.subr.bf16.mxu0 0
    %1887 = vmatpush1.bf16.msra.mxu0 0
    %1888 = vmatprep.subr.bf16.mxu0 0
    %1889 = vmatpush1.bf16.msra.mxu0 0
    %1890 = vmatprep.subr.bf16.mxu0 0
    %1891 = vmatpush1.bf16.msra.mxu0 0
    %1892 = vmatprep.subr.bf16.mxu0 0
    %1893 = vmatpush1.bf16.msra.mxu0 0
    %1894 = vmatprep.subr.bf16.mxu0 0
    %1895 = vmatpush1.bf16.msra.mxu0 0
    %1896 = vmatprep.subr.bf16.mxu0 0
    %1897 = vmatpush1.bf16.msra.mxu0 %v1881
    %1898 = vmatprep.subr.bf16.mxu0 0
    %1899 = vmatpush1.bf16.msra.mxu0 %v1880
    %1900 = vmatprep.subr.bf16.mxu0 0
    %1901 = vmatpush2.bf16.msra.mxu0 0
    %1902 = vmatprep.subr.bf16.mxu0 0
    %1903 = vmatpush2.bf16.msra.mxu0 0
    %1904 = vmatprep.subr.bf16.mxu0 0
    %1905 = vmatpush2.bf16.msra.mxu0 0
    %1906 = vmatprep.subr.bf16.mxu0 0
    %1907 = vmatpush2.bf16.msra.mxu0 0
    %1908 = vmatprep.subr.bf16.mxu0 0
    %1909 = vmatpush2.bf16.msra.mxu0 0
    %1910 = vmatprep.subr.bf16.mxu0 0
    %1911 = vmatpush2.bf16.msra.mxu0 0
    %1912 = vmatprep.subr.bf16.mxu0 0
    %1913 = vmatpush2.bf16.msra.mxu0 0
    %1914 = vmatprep.subr.bf16.mxu0 0
    %1915 = vmatpush2.bf16.msra.mxu0 0
    %1916 = vmatprep.mubr.bf16.mxu0 0
    %1917 = vmatmul.mubr.bf16.gmra.mxu0 %v203
    %v1918 = vpop.f32.mrf.mxu0
    %v1919 = vadd.f32 0.0, %v1918
    %v1920 = vpop.f32.mrf.mxu0
    %v1921 = vpop.f32.mrf.mxu0
    %v1922 = vadd.f32 0.0, %v1921
    %v1923 = vpop.f32.mrf.mxu0
    %1924 = vmatprep.mubr.bf16.mxu0 0
    %1925 = vmatmul.mubr.bf16.gmra.mxu0 %v206
    %v1926 = vpop.f32.mrf.mxu0
    %v1927 = vadd.f32 0.0, %v1926
    %v1928 = vpop.f32.mrf.mxu0
    %v1929 = vpop.f32.mrf.mxu0
    %v1930 = vadd.f32 0.0, %v1929
    %v1931 = vpop.f32.mrf.mxu0
    %1932 = vmatprep.mubr.bf16.mxu0 0
    %1933 = vmatmul.mubr.bf16.gmra.mxu0 %v209
    %v1934 = vpop.f32.mrf.mxu0
    %v1935 = vadd.f32 0.0, %v1934
    %v1936 = vpop.f32.mrf.mxu0
    %v1937 = vpop.f32.mrf.mxu0
    %v1938 = vadd.f32 0.0, %v1937
    %v1939 = vpop.f32.mrf.mxu0
    %1940 = vmatprep.mubr.bf16.mxu0 0
    %1941 = vmatmul.mubr.bf16.gmra.mxu0 %v212
    %v1942 = vpop.f32.mrf.mxu0
    %v1943 = vadd.f32 0.0, %v1942
    %v1944 = vpop.f32.mrf.mxu0
    %v1945 = vpop.f32.mrf.mxu0
    %v1946 = vadd.f32 0.0, %v1945
    %v1947 = vpop.f32.mrf.mxu0
    %1948 = vmatprep.mubr.bf16.mxu0 0
    %1949 = vmatmul.mubr.bf16.gmra.mxu0 %v215
    %v1950 = vpop.f32.mrf.mxu0
    %v1951 = vadd.f32 0.0, %v1950
    %v1952 = vpop.f32.mrf.mxu0
    %v1953 = vpop.f32.mrf.mxu0
    %v1954 = vadd.f32 0.0, %v1953
    %v1955 = vpop.f32.mrf.mxu0
    %1956 = vmatprep.mubr.bf16.mxu0 0
    %1957 = vmatmul.mubr.bf16.gmra.mxu0 %v218
    %v1958 = vpop.f32.mrf.mxu0
    %v1959 = vadd.f32 0.0, %v1958
    %v1960 = vpop.f32.mrf.mxu0
    %v1961 = vpop.f32.mrf.mxu0
    %v1962 = vadd.f32 0.0, %v1961
    %v1963 = vpop.f32.mrf.mxu0
    %1964 = vmatprep.mubr.bf16.mxu0 0
    %1965 = vmatmul.mubr.bf16.gmra.mxu0 %v221
    %v1966 = vpop.f32.mrf.mxu0
    %v1967 = vadd.f32 0.0, %v1966
    %v1968 = vpop.f32.mrf.mxu0
    %v1969 = vpop.f32.mrf.mxu0
    %v1970 = vadd.f32 0.0, %v1969
    %v1971 = vpop.f32.mrf.mxu0
    %1972 = vmatprep.mubr.bf16.mxu0 0
    %1973 = vmatmul.mubr.bf16.gmra.mxu0 %v224
    %v1974 = vpop.f32.mrf.mxu0
    %v1975 = vadd.f32 0.0, %v1974
    %v1976 = vpop.f32.mrf.mxu0
    %v1977 = vpop.f32.mrf.mxu0
    %v1978 = vadd.f32 0.0, %v1977
    %v1979 = vpop.f32.mrf.mxu0
    %1980 = vmatprep.mubr.bf16.mxu0 0
    %1981 = vmatmul.mubr.bf16.gmra.mxu0 %v227
    %v1982 = vpop.f32.mrf.mxu0
    %v1983 = vadd.f32 0.0, %v1982
    %v1984 = vpop.f32.mrf.mxu0
    %v1985 = vpop.f32.mrf.mxu0
    %v1986 = vadd.f32 0.0, %v1985
    %v1987 = vpop.f32.mrf.mxu0
    %1988 = vmatprep.mubr.bf16.mxu0 0
    %1989 = vmatmul.mubr.bf16.gmra.mxu0 %v230
    %v1990 = vpop.f32.mrf.mxu0
    %v1991 = vadd.f32 0.0, %v1990
    %v1992 = vpop.f32.mrf.mxu0
    %v1993 = vpop.f32.mrf.mxu0
    %v1994 = vadd.f32 0.0, %v1993
    %v1995 = vpop.f32.mrf.mxu0
    %1996 = vmatprep.mubr.bf16.mxu0 0
    %1997 = vmatmul.mubr.bf16.gmra.mxu0 %v233
    %v1998 = vpop.f32.mrf.mxu0
    %v1999 = vadd.f32 0.0, %v1998
    %v2000 = vpop.f32.mrf.mxu0
    %v2001 = vpop.f32.mrf.mxu0
    %v2002 = vadd.f32 0.0, %v2001
    %v2003 = vpop.f32.mrf.mxu0
    %2004 = vmatprep.mubr.bf16.mxu0 0
    %2005 = vmatmul.mubr.bf16.gmra.mxu0 %v236
    %v2006 = vpop.f32.mrf.mxu0
    %v2007 = vadd.f32 0.0, %v2006
    %v2008 = vpop.f32.mrf.mxu0
    %v2009 = vpop.f32.mrf.mxu0
    %v2010 = vadd.f32 0.0, %v2009
    %v2011 = vpop.f32.mrf.mxu0
    %2012 = vdwg.mxu0
    %v2013 = vadd.f32 %v1774, %v1919
    %v2014 = vadd.f32 %v1777, %v1922
    %v2015 = vadd.f32 %v1782, %v1927
    %v2016 = vadd.f32 %v1785, %v1930
    %v2017 = vadd.f32 %v1790, %v1935
    %v2018 = vadd.f32 %v1793, %v1938
    %v2019 = vadd.f32 %v1798, %v1943
    %v2020 = vadd.f32 %v1801, %v1946
    %v2021 = vadd.f32 %v1806, %v1951
    %v2022 = vadd.f32 %v1809, %v1954
    %v2023 = vadd.f32 %v1814, %v1959
    %v2024 = vadd.f32 %v1817, %v1962
    %v2025 = vadd.f32 %v1822, %v1967
    %v2026 = vadd.f32 %v1825, %v1970
    %v2027 = vadd.f32 %v1830, %v1975
    %v2028 = vadd.f32 %v1833, %v1978
    %v2029 = vadd.f32 %v1838, %v1983
    %v2030 = vadd.f32 %v1841, %v1986
    %v2031 = vadd.f32 %v1846, %v1991
    %v2032 = vadd.f32 %v1849, %v1994
    %v2033 = vadd.f32 %v1854, %v1999
    %v2034 = vadd.f32 %v1857, %v2002
    %v2035 = vadd.f32 %v1862, %v2007
    %v2036 = vadd.f32 %v1865, %v2010
    %v2037 = vld [vmem:[#allocation5 + $0xa0] sm:$0xf]
    %v2038 = vld [vmem:[#allocation5 + $0xa4] sm:$0xf]
    %v2039 = vld [vmem:[#allocation5 + $0xa8] sm:$0xf]
    %v2040 = vld [vmem:[#allocation5 + $0xac] sm:$0xf]
    %v2045 = vunpack.c.l.b16 %v2037
    %v2046 = vunpack.c.l.b16 %v2038
    %v2047 = vunpack.c.l.b16 %v2039
    %v2048 = vunpack.c.l.b16 %v2040
    %v2049 = vpack.c.b16 %v2046, %v2045
    %v2050 = vpack.c.b16 %v2048, %v2047
    %2053 = vmatprep.subr.bf16.mxu0 0
    %2054 = vmatpush1.bf16.msra.mxu0 0
    %2055 = vmatprep.subr.bf16.mxu0 0
    %2056 = vmatpush1.bf16.msra.mxu0 0
    %2057 = vmatprep.subr.bf16.mxu0 0
    %2058 = vmatpush1.bf16.msra.mxu0 0
    %2059 = vmatprep.subr.bf16.mxu0 0
    %2060 = vmatpush1.bf16.msra.mxu0 0
    %2061 = vmatprep.subr.bf16.mxu0 0
    %2062 = vmatpush1.bf16.msra.mxu0 0
    %2063 = vmatprep.subr.bf16.mxu0 0
    %2064 = vmatpush1.bf16.msra.mxu0 0
    %2065 = vmatprep.subr.bf16.mxu0 0
    %2066 = vmatpush1.bf16.msra.mxu0 %v2050
    %2067 = vmatprep.subr.bf16.mxu0 0
    %2068 = vmatpush1.bf16.msra.mxu0 %v2049
    %2069 = vmatprep.subr.bf16.mxu0 0
    %2070 = vmatpush2.bf16.msra.mxu0 0
    %2071 = vmatprep.subr.bf16.mxu0 0
    %2072 = vmatpush2.bf16.msra.mxu0 0
    %2073 = vmatprep.subr.bf16.mxu0 0
    %2074 = vmatpush2.bf16.msra.mxu0 0
    %2075 = vmatprep.subr.bf16.mxu0 0
    %2076 = vmatpush2.bf16.msra.mxu0 0
    %2077 = vmatprep.subr.bf16.mxu0 0
    %2078 = vmatpush2.bf16.msra.mxu0 0
    %2079 = vmatprep.subr.bf16.mxu0 0
    %2080 = vmatpush2.bf16.msra.mxu0 0
    %2081 = vmatprep.subr.bf16.mxu0 0
    %2082 = vmatpush2.bf16.msra.mxu0 0
    %2083 = vmatprep.subr.bf16.mxu0 0
    %2084 = vmatpush2.bf16.msra.mxu0 0
    %2085 = vmatprep.mubr.bf16.mxu0 0
    %2086 = vmatmul.mubr.bf16.gmra.mxu0 %v206
    %v2087 = vpop.f32.mrf.mxu0
    %v2088 = vadd.f32 0.0, %v2087
    %v2089 = vpop.f32.mrf.mxu0
    %v2090 = vpop.f32.mrf.mxu0
    %v2091 = vadd.f32 0.0, %v2090
    %v2092 = vpop.f32.mrf.mxu0
    %2093 = vmatprep.mubr.bf16.mxu0 0
    %2094 = vmatmul.mubr.bf16.gmra.mxu0 %v209
    %v2095 = vpop.f32.mrf.mxu0
    %v2096 = vadd.f32 0.0, %v2095
    %v2097 = vpop.f32.mrf.mxu0
    %v2098 = vpop.f32.mrf.mxu0
    %v2099 = vadd.f32 0.0, %v2098
    %v2100 = vpop.f32.mrf.mxu0
    %2101 = vmatprep.mubr.bf16.mxu0 0
    %2102 = vmatmul.mubr.bf16.gmra.mxu0 %v212
    %v2103 = vpop.f32.mrf.mxu0
    %v2104 = vadd.f32 0.0, %v2103
    %v2105 = vpop.f32.mrf.mxu0
    %v2106 = vpop.f32.mrf.mxu0
    %v2107 = vadd.f32 0.0, %v2106
    %v2108 = vpop.f32.mrf.mxu0
    %2109 = vmatprep.mubr.bf16.mxu0 0
    %2110 = vmatmul.mubr.bf16.gmra.mxu0 %v215
    %v2111 = vpop.f32.mrf.mxu0
    %v2112 = vadd.f32 0.0, %v2111
    %v2113 = vpop.f32.mrf.mxu0
    %v2114 = vpop.f32.mrf.mxu0
    %v2115 = vadd.f32 0.0, %v2114
    %v2116 = vpop.f32.mrf.mxu0
    %2117 = vmatprep.mubr.bf16.mxu0 0
    %2118 = vmatmul.mubr.bf16.gmra.mxu0 %v218
    %v2119 = vpop.f32.mrf.mxu0
    %v2120 = vadd.f32 0.0, %v2119
    %v2121 = vpop.f32.mrf.mxu0
    %v2122 = vpop.f32.mrf.mxu0
    %v2123 = vadd.f32 0.0, %v2122
    %v2124 = vpop.f32.mrf.mxu0
    %2125 = vmatprep.mubr.bf16.mxu0 0
    %2126 = vmatmul.mubr.bf16.gmra.mxu0 %v221
    %v2127 = vpop.f32.mrf.mxu0
    %v2128 = vadd.f32 0.0, %v2127
    %v2129 = vpop.f32.mrf.mxu0
    %v2130 = vpop.f32.mrf.mxu0
    %v2131 = vadd.f32 0.0, %v2130
    %v2132 = vpop.f32.mrf.mxu0
    %2133 = vmatprep.mubr.bf16.mxu0 0
    %2134 = vmatmul.mubr.bf16.gmra.mxu0 %v224
    %v2135 = vpop.f32.mrf.mxu0
    %v2136 = vadd.f32 0.0, %v2135
    %v2137 = vpop.f32.mrf.mxu0
    %v2138 = vpop.f32.mrf.mxu0
    %v2139 = vadd.f32 0.0, %v2138
    %v2140 = vpop.f32.mrf.mxu0
    %2141 = vmatprep.mubr.bf16.mxu0 0
    %2142 = vmatmul.mubr.bf16.gmra.mxu0 %v227
    %v2143 = vpop.f32.mrf.mxu0
    %v2144 = vadd.f32 0.0, %v2143
    %v2145 = vpop.f32.mrf.mxu0
    %v2146 = vpop.f32.mrf.mxu0
    %v2147 = vadd.f32 0.0, %v2146
    %v2148 = vpop.f32.mrf.mxu0
    %2149 = vmatprep.mubr.bf16.mxu0 0
    %2150 = vmatmul.mubr.bf16.gmra.mxu0 %v230
    %v2151 = vpop.f32.mrf.mxu0
    %v2152 = vadd.f32 0.0, %v2151
    %v2153 = vpop.f32.mrf.mxu0
    %v2154 = vpop.f32.mrf.mxu0
    %v2155 = vadd.f32 0.0, %v2154
    %v2156 = vpop.f32.mrf.mxu0
    %2157 = vmatprep.mubr.bf16.mxu0 0
    %2158 = vmatmul.mubr.bf16.gmra.mxu0 %v233
    %v2159 = vpop.f32.mrf.mxu0
    %v2160 = vadd.f32 0.0, %v2159
    %v2161 = vpop.f32.mrf.mxu0
    %v2162 = vpop.f32.mrf.mxu0
    %v2163 = vadd.f32 0.0, %v2162
    %v2164 = vpop.f32.mrf.mxu0
    %2165 = vmatprep.mubr.bf16.mxu0 0
    %2166 = vmatmul.mubr.bf16.gmra.mxu0 %v236
    %v2167 = vpop.f32.mrf.mxu0
    %v2168 = vadd.f32 0.0, %v2167
    %v2169 = vpop.f32.mrf.mxu0
    %v2170 = vpop.f32.mrf.mxu0
    %v2171 = vadd.f32 0.0, %v2170
    %v2172 = vpop.f32.mrf.mxu0
    %2173 = vmatprep.mubr.bf16.mxu0 0
    %2174 = vmatmul.mubr.bf16.gmra.mxu0 %v239
    %v2175 = vpop.f32.mrf.mxu0
    %v2176 = vadd.f32 0.0, %v2175
    %v2177 = vpop.f32.mrf.mxu0
    %v2178 = vpop.f32.mrf.mxu0
    %v2179 = vadd.f32 0.0, %v2178
    %v2180 = vpop.f32.mrf.mxu0
    %2181 = vdwg.mxu0
    %v2182 = vadd.f32 %v2013, %v2088
    %v2183 = vadd.f32 %v2014, %v2091
    %v2184 = vadd.f32 %v2015, %v2096
    %v2185 = vadd.f32 %v2016, %v2099
    %v2186 = vadd.f32 %v2017, %v2104
    %v2187 = vadd.f32 %v2018, %v2107
    %v2188 = vadd.f32 %v2019, %v2112
    %v2189 = vadd.f32 %v2020, %v2115
    %v2190 = vadd.f32 %v2021, %v2120
    %v2191 = vadd.f32 %v2022, %v2123
    %v2192 = vadd.f32 %v2023, %v2128
    %v2193 = vadd.f32 %v2024, %v2131
    %v2194 = vadd.f32 %v2025, %v2136
    %v2195 = vadd.f32 %v2026, %v2139
    %v2196 = vadd.f32 %v2027, %v2144
    %v2197 = vadd.f32 %v2028, %v2147
    %v2198 = vadd.f32 %v2029, %v2152
    %v2199 = vadd.f32 %v2030, %v2155
    %v2200 = vadd.f32 %v2031, %v2160
    %v2201 = vadd.f32 %v2032, %v2163
    %v2202 = vadd.f32 %v2033, %v2168
    %v2203 = vadd.f32 %v2034, %v2171
    %v2204 = vadd.f32 %v2035, %v2176
    %v2205 = vadd.f32 %v2036, %v2179
    %v2206 = vld [vmem:[#allocation5 + $0xb0] sm:$0xf]
    %v2207 = vld [vmem:[#allocation5 + $0xb4] sm:$0xf]
    %v2208 = vld [vmem:[#allocation5 + $0xb8] sm:$0xf]
    %v2209 = vld [vmem:[#allocation5 + $0xbc] sm:$0xf]
    %v2214 = vunpack.c.l.b16 %v2206
    %v2215 = vunpack.c.l.b16 %v2207
    %v2216 = vunpack.c.l.b16 %v2208
    %v2217 = vunpack.c.l.b16 %v2209
    %v2218 = vpack.c.b16 %v2215, %v2214
    %v2219 = vpack.c.b16 %v2217, %v2216
    %2222 = vmatprep.subr.bf16.mxu0 0
    %2223 = vmatpush1.bf16.msra.mxu0 0
    %2224 = vmatprep.subr.bf16.mxu0 0
    %2225 = vmatpush1.bf16.msra.mxu0 0
    %2226 = vmatprep.subr.bf16.mxu0 0
    %2227 = vmatpush1.bf16.msra.mxu0 0
    %2228 = vmatprep.subr.bf16.mxu0 0
    %2229 = vmatpush1.bf16.msra.mxu0 0
    %2230 = vmatprep.subr.bf16.mxu0 0
    %2231 = vmatpush1.bf16.msra.mxu0 0
    %2232 = vmatprep.subr.bf16.mxu0 0
    %2233 = vmatpush1.bf16.msra.mxu0 0
    %2234 = vmatprep.subr.bf16.mxu0 0
    %2235 = vmatpush1.bf16.msra.mxu0 %v2219
    %2236 = vmatprep.subr.bf16.mxu0 0
    %2237 = vmatpush1.bf16.msra.mxu0 %v2218
    %2238 = vmatprep.subr.bf16.mxu0 0
    %2239 = vmatpush2.bf16.msra.mxu0 0
    %2240 = vmatprep.subr.bf16.mxu0 0
    %2241 = vmatpush2.bf16.msra.mxu0 0
    %2242 = vmatprep.subr.bf16.mxu0 0
    %2243 = vmatpush2.bf16.msra.mxu0 0
    %2244 = vmatprep.subr.bf16.mxu0 0
    %2245 = vmatpush2.bf16.msra.mxu0 0
    %2246 = vmatprep.subr.bf16.mxu0 0
    %2247 = vmatpush2.bf16.msra.mxu0 0
    %2248 = vmatprep.subr.bf16.mxu0 0
    %2249 = vmatpush2.bf16.msra.mxu0 0
    %2250 = vmatprep.subr.bf16.mxu0 0
    %2251 = vmatpush2.bf16.msra.mxu0 0
    %2252 = vmatprep.subr.bf16.mxu0 0
    %2253 = vmatpush2.bf16.msra.mxu0 0
    %2254 = vmatprep.mubr.bf16.mxu0 0
    %2255 = vmatmul.mubr.bf16.gmra.mxu0 %v209
    %v2256 = vpop.f32.mrf.mxu0
    %v2257 = vadd.f32 0.0, %v2256
    %v2258 = vpop.f32.mrf.mxu0
    %v2259 = vpop.f32.mrf.mxu0
    %v2260 = vadd.f32 0.0, %v2259
    %v2261 = vpop.f32.mrf.mxu0
    %2262 = vmatprep.mubr.bf16.mxu0 0
    %2263 = vmatmul.mubr.bf16.gmra.mxu0 %v212
    %v2264 = vpop.f32.mrf.mxu0
    %v2265 = vadd.f32 0.0, %v2264
    %v2266 = vpop.f32.mrf.mxu0
    %v2267 = vpop.f32.mrf.mxu0
    %v2268 = vadd.f32 0.0, %v2267
    %v2269 = vpop.f32.mrf.mxu0
    %2270 = vmatprep.mubr.bf16.mxu0 0
    %2271 = vmatmul.mubr.bf16.gmra.mxu0 %v215
    %v2272 = vpop.f32.mrf.mxu0
    %v2273 = vadd.f32 0.0, %v2272
    %v2274 = vpop.f32.mrf.mxu0
    %v2275 = vpop.f32.mrf.mxu0
    %v2276 = vadd.f32 0.0, %v2275
    %v2277 = vpop.f32.mrf.mxu0
    %2278 = vmatprep.mubr.bf16.mxu0 0
    %2279 = vmatmul.mubr.bf16.gmra.mxu0 %v218
    %v2280 = vpop.f32.mrf.mxu0
    %v2281 = vadd.f32 0.0, %v2280
    %v2282 = vpop.f32.mrf.mxu0
    %v2283 = vpop.f32.mrf.mxu0
    %v2284 = vadd.f32 0.0, %v2283
    %v2285 = vpop.f32.mrf.mxu0
    %2286 = vmatprep.mubr.bf16.mxu0 0
    %2287 = vmatmul.mubr.bf16.gmra.mxu0 %v221
    %v2288 = vpop.f32.mrf.mxu0
    %v2289 = vadd.f32 0.0, %v2288
    %v2290 = vpop.f32.mrf.mxu0
    %v2291 = vpop.f32.mrf.mxu0
    %v2292 = vadd.f32 0.0, %v2291
    %v2293 = vpop.f32.mrf.mxu0
    %2294 = vmatprep.mubr.bf16.mxu0 0
    %2295 = vmatmul.mubr.bf16.gmra.mxu0 %v224
    %v2296 = vpop.f32.mrf.mxu0
    %v2297 = vadd.f32 0.0, %v2296
    %v2298 = vpop.f32.mrf.mxu0
    %v2299 = vpop.f32.mrf.mxu0
    %v2300 = vadd.f32 0.0, %v2299
    %v2301 = vpop.f32.mrf.mxu0
    %2302 = vmatprep.mubr.bf16.mxu0 0
    %2303 = vmatmul.mubr.bf16.gmra.mxu0 %v227
    %v2304 = vpop.f32.mrf.mxu0
    %v2305 = vadd.f32 0.0, %v2304
    %v2306 = vpop.f32.mrf.mxu0
    %v2307 = vpop.f32.mrf.mxu0
    %v2308 = vadd.f32 0.0, %v2307
    %v2309 = vpop.f32.mrf.mxu0
    %2310 = vmatprep.mubr.bf16.mxu0 0
    %2311 = vmatmul.mubr.bf16.gmra.mxu0 %v230
    %v2312 = vpop.f32.mrf.mxu0
    %v2313 = vadd.f32 0.0, %v2312
    %v2314 = vpop.f32.mrf.mxu0
    %v2315 = vpop.f32.mrf.mxu0
    %v2316 = vadd.f32 0.0, %v2315
    %v2317 = vpop.f32.mrf.mxu0
    %2318 = vmatprep.mubr.bf16.mxu0 0
    %2319 = vmatmul.mubr.bf16.gmra.mxu0 %v233
    %v2320 = vpop.f32.mrf.mxu0
    %v2321 = vadd.f32 0.0, %v2320
    %v2322 = vpop.f32.mrf.mxu0
    %v2323 = vpop.f32.mrf.mxu0
    %v2324 = vadd.f32 0.0, %v2323
    %v2325 = vpop.f32.mrf.mxu0
    %2326 = vmatprep.mubr.bf16.mxu0 0
    %2327 = vmatmul.mubr.bf16.gmra.mxu0 %v236
    %v2328 = vpop.f32.mrf.mxu0
    %v2329 = vadd.f32 0.0, %v2328
    %v2330 = vpop.f32.mrf.mxu0
    %v2331 = vpop.f32.mrf.mxu0
    %v2332 = vadd.f32 0.0, %v2331
    %v2333 = vpop.f32.mrf.mxu0
    %2334 = vmatprep.mubr.bf16.mxu0 0
    %2335 = vmatmul.mubr.bf16.gmra.mxu0 %v239
    %v2336 = vpop.f32.mrf.mxu0
    %v2337 = vadd.f32 0.0, %v2336
    %v2338 = vpop.f32.mrf.mxu0
    %v2339 = vpop.f32.mrf.mxu0
    %v2340 = vadd.f32 0.0, %v2339
    %v2341 = vpop.f32.mrf.mxu0
    %2342 = vmatprep.mubr.bf16.mxu0 0
    %2343 = vmatmul.mubr.bf16.gmra.mxu0 %v573
    %v2344 = vpop.f32.mrf.mxu0
    %v2345 = vadd.f32 0.0, %v2344
    %v2346 = vpop.f32.mrf.mxu0
    %v2347 = vpop.f32.mrf.mxu0
    %v2348 = vadd.f32 0.0, %v2347
    %v2349 = vpop.f32.mrf.mxu0
    %2350 = vdwg.mxu0
    %v2351 = vadd.f32 %v2182, %v2257
    %v2352 = vadd.f32 %v2183, %v2260
    %v2353 = vadd.f32 %v2184, %v2265
    %v2354 = vadd.f32 %v2185, %v2268
    %v2355 = vadd.f32 %v2186, %v2273
    %v2356 = vadd.f32 %v2187, %v2276
    %v2357 = vadd.f32 %v2188, %v2281
    %v2358 = vadd.f32 %v2189, %v2284
    %v2359 = vadd.f32 %v2190, %v2289
    %v2360 = vadd.f32 %v2191, %v2292
    %v2361 = vadd.f32 %v2192, %v2297
    %v2362 = vadd.f32 %v2193, %v2300
    %v2363 = vadd.f32 %v2194, %v2305
    %v2364 = vadd.f32 %v2195, %v2308
    %v2365 = vadd.f32 %v2196, %v2313
    %v2366 = vadd.f32 %v2197, %v2316
    %v2367 = vadd.f32 %v2198, %v2321
    %v2368 = vadd.f32 %v2199, %v2324
    %v2369 = vadd.f32 %v2200, %v2329
    %v2370 = vadd.f32 %v2201, %v2332
    %v2371 = vadd.f32 %v2202, %v2337
    %v2372 = vadd.f32 %v2203, %v2340
    %v2373 = vadd.f32 %v2204, %v2345
    %v2374 = vadd.f32 %v2205, %v2348
    %v2375 = vlaneseq
    %v2376 = vshrl.u32 %v2375, 7
    %v2377 = vsub.s32 2, %v2376
    %v2378 = vrot.slane %v107, %v2377
    %v2379 = vadd.f32 %v2351, %v2378
    %v2380 = vadd.f32 %v2352, %v2378
    %v2381 = vadd.f32 %v2353, %v2378
    %v2382 = vadd.f32 %v2354, %v2378
    %v2383 = vadd.f32 %v2355, %v2378
    %v2384 = vadd.f32 %v2356, %v2378
    %v2385 = vadd.f32 %v2357, %v2378
    %v2386 = vadd.f32 %v2358, %v2378
    %v2387 = vadd.f32 %v2359, %v2378
    %v2388 = vadd.f32 %v2360, %v2378
    %v2389 = vadd.f32 %v2361, %v2378
    %v2390 = vadd.f32 %v2362, %v2378
    %v2391 = vadd.f32 %v2363, %v2378
    %v2392 = vadd.f32 %v2364, %v2378
    %v2393 = vadd.f32 %v2365, %v2378
    %v2394 = vadd.f32 %v2366, %v2378
    %v2395 = vadd.f32 %v2367, %v2378
    %v2396 = vadd.f32 %v2368, %v2378
    %v2397 = vadd.f32 %v2369, %v2378
    %v2398 = vadd.f32 %v2370, %v2378
    %v2399 = vadd.f32 %v2371, %v2378
    %v2400 = vadd.f32 %v2372, %v2378
    %v2401 = vadd.f32 %v2373, %v2378
    %v2402 = vadd.f32 %v2374, %v2378
    %v2403 = vmax.f32 %v2379, 0.0
    %v2404 = vmax.f32 %v2380, 0.0
    %v2405 = vmax.f32 %v2381, 0.0
    %v2406 = vmax.f32 %v2382, 0.0
    %v2407 = vmax.f32 %v2383, 0.0
    %v2408 = vmax.f32 %v2384, 0.0
    %v2409 = vmax.f32 %v2385, 0.0
    %v2410 = vmax.f32 %v2386, 0.0
    %v2411 = vmax.f32 %v2387, 0.0
    %v2412 = vmax.f32 %v2388, 0.0
    %v2413 = vmax.f32 %v2389, 0.0
    %v2414 = vmax.f32 %v2390, 0.0
    %v2415 = vmax.f32 %v2391, 0.0
    %v2416 = vmax.f32 %v2392, 0.0
    %v2417 = vmax.f32 %v2393, 0.0
    %v2418 = vmax.f32 %v2394, 0.0
    %v2419 = vmax.f32 %v2395, 0.0
    %v2420 = vmax.f32 %v2396, 0.0
    %v2421 = vmax.f32 %v2397, 0.0
    %v2422 = vmax.f32 %v2398, 0.0
    %v2423 = vmax.f32 %v2399, 0.0
    %v2424 = vmax.f32 %v2400, 0.0
    %v2425 = vmax.f32 %v2401, 0.0
    %v2426 = vmax.f32 %v2402, 0.0
    %v2427 = vmax.f32 %v2403, %v2407
    %v2428 = vmax.f32 %v2405, %v2409
    %v2429 = vmax.f32 %v2427, %v2411
    %v2430 = vmax.f32 %v2428, %v2413
    %v2431 = vmax.f32 %v2429, %v2415
    %v2432 = vmax.f32 %v2430, %v2417
    %v2433 = vmax.f32 %v2431, %v2419
    %v2434 = vmax.f32 %v2432, %v2421
    %v2435 = vmax.f32 %v2433, %v2423
    %v2436 = vmax.f32 %v2434, %v2425
    %v2437 = vmax.f32 %v2435, %v2436
    %v2438 = vmax.f32 %v2404, %v2408
    %v2439 = vmax.f32 %v2406, %v2410
    %v2440 = vmax.f32 %v2438, %v2412
    %v2441 = vmax.f32 %v2439, %v2414
    %v2442 = vmax.f32 %v2440, %v2416
    %v2443 = vmax.f32 %v2441, %v2418
    %v2444 = vmax.f32 %v2442, %v2420
    %v2445 = vmax.f32 %v2443, %v2422
    %v2446 = vmax.f32 %v2444, %v2424
    %v2447 = vmax.f32 %v2445, %v2426
    %v2448 = vmax.f32 %v2446, %v2447
    %v2449 = vld [vmem:[#allocation8] sm:$0xff]
    %v2450 = vld [vmem:[#allocation8 + $0x8] sm:$0xff]
    %v2451 = vld [vmem:[#allocation8 + $0x10] sm:$0xff]
    %v2452 = vld [vmem:[#allocation8 + $0x18] sm:$0xff]
    %v2453 = vld [vmem:[#allocation8 + $0x20] sm:$0xff]
    %v2454 = vld [vmem:[#allocation8 + $0x28] sm:$0xff]
    %v2455 = vld [vmem:[#allocation8 + $0x30] sm:$0xff]
    %v2456 = vld [vmem:[#allocation8 + $0x38] sm:$0xff]
    %v2457 = vld [vmem:[#allocation8 + $0x40] sm:$0xff]
    %v2458 = vld [vmem:[#allocation8 + $0x48] sm:$0xff]
    %v2459 = vld [vmem:[#allocation8 + $0x50] sm:$0xff]
    %v2460 = vld [vmem:[#allocation8 + $0x58] sm:$0xff]
    %v2461 = vld [vmem:[#allocation8 + $0x60] sm:$0xff]
    %v2462 = vld [vmem:[#allocation8 + $0x68] sm:$0xff]
    %v2463 = vld [vmem:[#allocation8 + $0x70] sm:$0xff]
    %v2464 = vld [vmem:[#allocation8 + $0x78] sm:$0xff]
    %v2465 = vld [vmem:[#allocation8 + $0x80] sm:$0xff]
    %v2466 = vld [vmem:[#allocation8 + $0x88] sm:$0xff]
    %v2467 = vld [vmem:[#allocation8 + $0x90] sm:$0xff]
    %v2468 = vld [vmem:[#allocation8 + $0x98] sm:$0xff]
    %v2469 = vld [vmem:[#allocation8 + $0xa0] sm:$0xff]
    %v2470 = vld [vmem:[#allocation8 + $0xa8] sm:$0xff]
    %v2471 = vld [vmem:[#allocation8 + $0xb0] sm:$0xff]
    %v2472 = vld [vmem:[#allocation8 + $0xb8] sm:$0xff]
    %v2473 = vld [vmem:[#allocation8 + $0xc0] sm:$0xff]
    %v2474 = vld [vmem:[#allocation8 + $0xc8] sm:$0xff]
    %v2475 = vld [vmem:[#allocation8 + $0xd0] sm:$0xff]
    %v2476 = vld [vmem:[#allocation8 + $0xd8] sm:$0xff]
    %v2477 = vld [vmem:[#allocation8 + $0xe0] sm:$0xff]
    %v2478 = vld [vmem:[#allocation8 + $0xe8] sm:$0xff]
    %v2479 = vld [vmem:[#allocation8 + $0xf0] sm:$0xff]
    %v2480 = vld [vmem:[#allocation8 + $0xf8] sm:$0xff]
    %v2481 = vld [vmem:[#allocation8 + $0x100] sm:$0xff]
    %v2482 = vld [vmem:[#allocation8 + $0x108] sm:$0xff]
    %v2483 = vld [vmem:[#allocation8 + $0x110] sm:$0xff]
    %v2484 = vld [vmem:[#allocation8 + $0x118] sm:$0xff]
    %v2485 = vld [vmem:[#allocation8 + $0x120] sm:$0xff]
    %v2486 = vld [vmem:[#allocation8 + $0x128] sm:$0xff]
    %v2487 = vld [vmem:[#allocation8 + $0x130] sm:$0xff]
    %v2488 = vld [vmem:[#allocation8 + $0x138] sm:$0xff]
    %v2489 = vld [vmem:[#allocation8 + $0x140] sm:$0xff]
    %v2490 = vld [vmem:[#allocation8 + $0x148] sm:$0xff]
    %v2491 = vld [vmem:[#allocation8 + $0x150] sm:$0xff]
    %v2492 = vld [vmem:[#allocation8 + $0x158] sm:$0xff]
    %v2493 = vld [vmem:[#allocation8 + $0x160] sm:$0xff]
    %v2494 = vld [vmem:[#allocation8 + $0x168] sm:$0xff]
    %v2495 = vld [vmem:[#allocation8 + $0x170] sm:$0xff]
    %v2496 = vld [vmem:[#allocation8 + $0x178] sm:$0xff]
    %v2497 = vld [vmem:[%s4] sm:$0x1]
    %v2499 = vlaneseq
    %v2500 = vshrl.u32 %v2499, 7
    %v2501 = vsub.s32 0, %v2500
    %v2502 = vrot.slane %v2497, %v2501
    %2504 = vmatprep.subr.mxu0 0.0
    %2505 = vmatpush1.msra.mxu0 %v2464
    %2506 = vmatprep.subr.mxu0 0.0
    %2507 = vmatpush1.msra.mxu0 %v2463
    %2508 = vmatprep.subr.mxu0 0.0
    %2509 = vmatpush1.msra.mxu0 %v2462
    %2510 = vmatprep.subr.mxu0 0.0
    %2511 = vmatpush1.msra.mxu0 %v2461
    %2512 = vmatprep.subr.mxu0 0.0
    %2513 = vmatpush1.msra.mxu0 %v2460
    %2514 = vmatprep.subr.mxu0 0.0
    %2515 = vmatpush1.msra.mxu0 %v2459
    %2516 = vmatprep.subr.mxu0 0.0
    %2517 = vmatpush1.msra.mxu0 %v2458
    %2518 = vmatprep.subr.mxu0 0.0
    %2519 = vmatpush1.msra.mxu0 %v2457
    %2520 = vmatprep.subr.mxu0 0.0
    %2521 = vmatpush1.msra.mxu0 %v2456
    %2522 = vmatprep.subr.mxu0 0.0
    %2523 = vmatpush1.msra.mxu0 %v2455
    %2524 = vmatprep.subr.mxu0 0.0
    %2525 = vmatpush1.msra.mxu0 %v2454
    %2526 = vmatprep.subr.mxu0 0.0
    %2527 = vmatpush1.msra.mxu0 %v2453
    %2528 = vmatprep.subr.mxu0 0.0
    %2529 = vmatpush1.msra.mxu0 %v2452
    %2530 = vmatprep.subr.mxu0 0.0
    %2531 = vmatpush1.msra.mxu0 %v2451
    %2532 = vmatprep.subr.mxu0 0.0
    %2533 = vmatpush1.msra.mxu0 %v2450
    %2534 = vmatprep.subr.mxu0 0.0
    %2535 = vmatpush1.msra.mxu0 %v2449
    %2536 = vmatprep.subr.mxu0 0.0
    %2537 = vmatpush2.msra.mxu0 %v2480
    %2538 = vmatprep.subr.mxu0 0.0
    %2539 = vmatpush2.msra.mxu0 %v2479
    %2540 = vmatprep.subr.mxu0 0.0
    %2541 = vmatpush2.msra.mxu0 %v2478
    %2542 = vmatprep.subr.mxu0 0.0
    %2543 = vmatpush2.msra.mxu0 %v2477
    %2544 = vmatprep.subr.mxu0 0.0
    %2545 = vmatpush2.msra.mxu0 %v2476
    %2546 = vmatprep.subr.mxu0 0.0
    %2547 = vmatpush2.msra.mxu0 %v2475
    %2548 = vmatprep.subr.mxu0 0.0
    %2549 = vmatpush2.msra.mxu0 %v2474
    %2550 = vmatprep.subr.mxu0 0.0
    %2551 = vmatpush2.msra.mxu0 %v2473
    %2552 = vmatprep.subr.mxu0 0.0
    %2553 = vmatpush2.msra.mxu0 %v2472
    %2554 = vmatprep.subr.mxu0 0.0
    %2555 = vmatpush2.msra.mxu0 %v2471
    %2556 = vmatprep.subr.mxu0 0.0
    %2557 = vmatpush2.msra.mxu0 %v2470
    %2558 = vmatprep.subr.mxu0 0.0
    %2559 = vmatpush2.msra.mxu0 %v2469
    %2560 = vmatprep.subr.mxu0 0.0
    %2561 = vmatpush2.msra.mxu0 %v2468
    %2562 = vmatprep.subr.mxu0 0.0
    %2563 = vmatpush2.msra.mxu0 %v2467
    %2564 = vmatprep.subr.mxu0 0.0
    %2565 = vmatpush2.msra.mxu0 %v2466
    %2566 = vmatprep.subr.mxu0 0.0
    %2567 = vmatpush2.msra.mxu0 %v2465
    %2568 = vmatprep.mubr.f32.mxu0 %v1565
    %2569 = vmatmul.mubr.f32.gmra.mxu0 %v820
    %v2570 = vpop.f32.mrf.mxu0
    %v2571 = vadd.f32 %v2502, %v2570
    %v2572 = vpop.f32.mrf.mxu0
    %2573 = vmatprep.mubr.f32.mxu0 %v1577
    %2574 = vmatmul.mubr.f32.gmra.mxu0 %v833
    %v2575 = vpop.f32.mrf.mxu0
    %v2576 = vadd.f32 %v2502, %v2575
    %v2577 = vpop.f32.mrf.mxu0
    %2578 = vdwg.mxu0
    %2579 = vmatprep.subr.mxu0 0.0
    %2580 = vmatpush1.msra.mxu0 %v2496
    %2581 = vmatprep.subr.mxu0 0.0
    %2582 = vmatpush1.msra.mxu0 %v2495
    %2583 = vmatprep.subr.mxu0 0.0
    %2584 = vmatpush1.msra.mxu0 %v2494
    %2585 = vmatprep.subr.mxu0 0.0
    %2586 = vmatpush1.msra.mxu0 %v2493
    %2587 = vmatprep.subr.mxu0 0.0
    %2588 = vmatpush1.msra.mxu0 %v2492
    %2589 = vmatprep.subr.mxu0 0.0
    %2590 = vmatpush1.msra.mxu0 %v2491
    %2591 = vmatprep.subr.mxu0 0.0
    %2592 = vmatpush1.msra.mxu0 %v2490
    %2593 = vmatprep.subr.mxu0 0.0
    %2594 = vmatpush1.msra.mxu0 %v2489
    %2595 = vmatprep.subr.mxu0 0.0
    %2596 = vmatpush1.msra.mxu0 %v2488
    %2597 = vmatprep.subr.mxu0 0.0
    %2598 = vmatpush1.msra.mxu0 %v2487
    %2599 = vmatprep.subr.mxu0 0.0
    %2600 = vmatpush1.msra.mxu0 %v2486
    %2601 = vmatprep.subr.mxu0 0.0
    %2602 = vmatpush1.msra.mxu0 %v2485
    %2603 = vmatprep.subr.mxu0 0.0
    %2604 = vmatpush1.msra.mxu0 %v2484
    %2605 = vmatprep.subr.mxu0 0.0
    %2606 = vmatpush1.msra.mxu0 %v2483
    %2607 = vmatprep.subr.mxu0 0.0
    %2608 = vmatpush1.msra.mxu0 %v2482
    %2609 = vmatprep.subr.mxu0 0.0
    %2610 = vmatpush1.msra.mxu0 %v2481
    %2611 = vmatprep.subr.mxu0 0.0
    %2612 = vmatpush2.msra.mxu0 0.0
    %2613 = vmatprep.subr.mxu0 0.0
    %2614 = vmatpush2.msra.mxu0 0.0
    %2615 = vmatprep.subr.mxu0 0.0
    %2616 = vmatpush2.msra.mxu0 0.0
    %2617 = vmatprep.subr.mxu0 0.0
    %2618 = vmatpush2.msra.mxu0 0.0
    %2619 = vmatprep.subr.mxu0 0.0
    %2620 = vmatpush2.msra.mxu0 0.0
    %2621 = vmatprep.subr.mxu0 0.0
    %2622 = vmatpush2.msra.mxu0 0.0
    %2623 = vmatprep.subr.mxu0 0.0
    %2624 = vmatpush2.msra.mxu0 0.0
    %2625 = vmatprep.subr.mxu0 0.0
    %2626 = vmatpush2.msra.mxu0 0.0
    %2627 = vmatprep.subr.mxu0 0.0
    %2628 = vmatpush2.msra.mxu0 0.0
    %2629 = vmatprep.subr.mxu0 0.0
    %2630 = vmatpush2.msra.mxu0 0.0
    %2631 = vmatprep.subr.mxu0 0.0
    %2632 = vmatpush2.msra.mxu0 0.0
    %2633 = vmatprep.subr.mxu0 0.0
    %2634 = vmatpush2.msra.mxu0 0.0
    %2635 = vmatprep.subr.mxu0 0.0
    %2636 = vmatpush2.msra.mxu0 0.0
    %2637 = vmatprep.subr.mxu0 0.0
    %2638 = vmatpush2.msra.mxu0 0.0
    %2639 = vmatprep.subr.mxu0 0.0
    %2640 = vmatpush2.msra.mxu0 0.0
    %2641 = vmatprep.subr.mxu0 0.0
    %2642 = vmatpush2.msra.mxu0 0.0
    %2643 = vmatprep.mubr.f32.mxu0 0.0
    %2644 = vmatmul.mubr.f32.gmra.mxu0 %v2437
    %v2645 = vpop.f32.mrf.mxu0
    %v2646 = vadd.f32 %v2571, %v2645
    %v2647 = vpop.f32.mrf.mxu0
    %2648 = vmatprep.mubr.f32.mxu0 0.0
    %2649 = vmatmul.mubr.f32.gmra.mxu0 %v2448
    %v2650 = vpop.f32.mrf.mxu0
    %v2651 = vadd.f32 %v2576, %v2650
    %v2652 = vpop.f32.mrf.mxu0
    %2653 = vdwg.mxu0
    %2654 = vst [vmem:[#allocation10] sm:$0xff] %v2646
    %2655 = vst [vmem:[#allocation10 + $0x8] sm:$0xff] %v2651
    // Predicated region
    $region38: #{tpu_custom_call.1} parent=1 // pred_check
      _
    $region39: #{tpu_custom_call.1} parent=1 // pred_check_branch
      %2657 = sbr.rel (0) target = $region41
    $region40: #{tpu_custom_call.1} parent=1 // pred_region
      %s2659 = ssub.s32 256, 256
      %2660 = vsyncadd [#allocation4], %s2659
      %s2661 = sshll.u32 [#allocation10], 4
      %s2662 = int_to_ptr.vmem [resolvable:$true] %s2661
      %2667 = dma.vmem_to_hbm [thread:$0]  %s2662, 256, %s5, [#allocation4], 128, 128, 8
    $region41: #{tpu_custom_call.1} parent=1 // pred_fallthru
      _
    // Predicated region
    $region42: #{tpu_custom_call.1} parent=1 // pred_check
      _
    $region43: #{tpu_custom_call.1} parent=1 // pred_check_branch
      %2669 = sbr.rel (0) target = $region45
    $region44: #{tpu_custom_call.1} parent=1 // pred_region
      %2670 = dma.done [#allocation4], 256
    $region45: #{tpu_custom_call.1} parent=1 // pred_fallthru
      _
    %2671 = vsyncpa [#allocation3], 1
    %2672 = vsyncpa [#allocation6], 1
    %2673 = vsyncpa [#allocation9], 1
    %2674 = vsyncpa [#allocation4], 1

</llo_original>
